<compile_context>
chip_gen: v6e
topology: v6e:2x2x1
jax: 0.10.0
libtpu: 0.0.40
codegen_flags: <defaults>
</compile_context>

<pallas_src>
import jax
import jax.numpy as jnp
from jax import lax
from jax.experimental import pallas as pl
from jax.experimental.pallas import tpu as pltpu

# ---- small demo configuration (consistent with the module's __init__) ----
INPUT_DIM = 16
OUTPUT_DIM = 16
NUM_HEADS = 4        # structural only: heads cancel exactly with seq_len == 1
NUM_LAYERS = 2
D_MODEL = 32
DIM_FF = 64
MAX_TIME = 100
BATCH = 8
EPS = 1e-5           # nn.LayerNorm default

# ---- static slab row offsets (all multiples of 8 -> sublane-aligned) ------
_W_EMB = (0, 16)      # (16, 32) embedding weight
_ENC_WA = (16, 48)    # (32, 32) encoder fused attention (Wv @ Wo)
_ENC_W2 = (48, 112)   # (64, 32) encoder linear2
_DEC_WS = (112, 144)  # (32, 32) decoder fused self-attn
_DEC_WC = (144, 176)  # (32, 32) decoder fused "cross"-attn (memory unused)
_DEC_W2 = (176, 240)  # (64, 32) decoder linear2


# ------------------------------ fused kernel -------------------------------

def _fused_forward_kernel(x_ref, t_ref, temb_ref, w32_ref, w64_ref, wout_ref,
                          b32_ref, b64_ref, bout_ref, o_ref):
    f32 = jnp.float32

    def mm(a, b):
        return jnp.dot(a, b, preferred_element_type=f32)

    def ln(v, g, b):
        mu = jnp.mean(v, axis=-1, keepdims=True)
        var = jnp.mean((v - mu) ** 2, axis=-1, keepdims=True)
        return (v - mu) * lax.rsqrt(var + EPS) * g + b

    def w32(lo_hi):
        lo, hi = lo_hi
        return w32_ref[lo:hi, :]

    def b32(i):
        return b32_ref[i:i + 1, :]

    def b64(i):
        return b64_ref[i:i + 1, :]

    # --- embedding(x) + time_step_embedding(t) + positional_encoding --------
    # positional_encoding is folded into the embedding bias (slab row 0) on
    # the host; the time-embedding gather is a one-hot matmul over the
    # VMEM-resident (100, 32) table.
    onehot = (lax.broadcasted_iota(jnp.int32, (BATCH, MAX_TIME), 1)
              == t_ref[...]).astype(f32)
    h = mm(x_ref[...], w32(_W_EMB)) + b32(0) + mm(onehot, temb_ref[...])

    # --- encoder: NUM_LAYERS deepcopy-identical CustomEncoderLayer ----------
    enc_wa, enc_w1, enc_w2 = w32(_ENC_WA), w64_ref[0:32, :], w32(_ENC_W2)
    for _ in range(NUM_LAYERS):
        # self-attention over a length-1 sequence == fused value/out projection
        attn = mm(h, enc_wa) + b32(1)
        h = ln(h + attn, b32(3), b32(4))                               # norm1
        ff = mm(jnp.maximum(mm(h, enc_w1) + b64(0), 0.0), enc_w2) + b32(2)
        h = ln(h + ff, b32(5), b32(6))                                 # norm2

    # --- decoder: NUM_LAYERS deepcopy-identical CustomDecoderLayer ----------
    # NOTE: CustomDecoderLayer.forward never uses `memory` (faithful to ref).
    dec_ws, dec_wc = w32(_DEC_WS), w32(_DEC_WC)
    dec_w1, dec_w2 = w64_ref[32:64, :], w32(_DEC_W2)
    for _ in range(NUM_LAYERS):
        a1 = mm(h, dec_ws) + b32(7)
        h = ln(h + a1, b32(10), b32(11))                               # norm1
        a2 = mm(h, dec_wc) + b32(8)
        h = ln(h + a2, b32(12), b32(13))                               # norm2
        ff = mm(jnp.maximum(mm(h, dec_w1) + b64(1), 0.0), dec_w2) + b32(9)
        h = ln(h + ff, b32(14), b32(15))                               # norm3

    # --- decoder_output.mean(dim=1) over length-1 seq axis == identity ------
    o_ref[...] = mm(h, wout_ref[...]) + bout_ref[...]


# ------------------------------ pallas_call glue ----------------------------

def _vmem_spec(shape):
    nd = len(shape)
    return pl.BlockSpec(shape, lambda i, _nd=nd: (0,) * _nd)


@jax.jit
def model_forward(params, x_in_pressures_flat, x_time_steps):
    t = x_time_steps.astype(jnp.int32).reshape(BATCH, 1)
    args = (x_in_pressures_flat, t, params["time_emb"],
            params["w32"], params["w64"], params["w_out"],
            params["b32"], params["b64"], params["b_out"])
    return pl.pallas_call(
        _fused_forward_kernel,
        grid=(1,),
        in_specs=[_vmem_spec(a.shape) for a in args],
        out_specs=_vmem_spec((BATCH, OUTPUT_DIM)),
        out_shape=jax.ShapeDtypeStruct((BATCH, OUTPUT_DIM), jnp.float32),
        compiler_params=pltpu.CompilerParams(
            dimension_semantics=("arbitrary",)),
    )(*args)


# ------------------------------ parameter init ------------------------------

def init_params(key):
    keys = iter(jax.random.split(key, 32))
    D, F = D_MODEL, DIM_FF

    def lin(fan_in, shape):
        bound = 1.0 / (fan_in ** 0.5)        # nn.Linear default init range
        return jax.random.uniform(next(keys), shape, jnp.float32, -bound, bound)

    def fused_attn():
        # seq_len == 1 -> softmax over one key == 1 exactly
        #   attn(x) = x @ (Wv @ Wo) + (bv @ Wo + bo); q/k/rel-bias cancel.
        wv, bv = lin(D, (D, D)), lin(D, (1, D))
        wo, bo = lin(D, (D, D)), lin(D, (1, D))
        return jnp.dot(wv, wo), jnp.dot(bv, wo) + bo

    ones = lambda: jnp.ones((1, D), jnp.float32)
    zeros = lambda: jnp.zeros((1, D), jnp.float32)

    # --- one encoder layer (clones() deep-copies -> all layers identical) ---
    enc_wa, enc_ba = fused_attn()
    enc_w1, enc_b1 = lin(D, (D, F)), lin(D, (1, F))
    enc_w2, enc_b2 = lin(F, (F, D)), lin(F, (1, D))
    enc_g1, enc_be1 = ones(), zeros()
    enc_g2, enc_be2 = ones(), zeros()

    # --- one decoder layer --------------------------------------------------
    dec_ws, dec_bs = fused_attn()
    dec_wc, dec_bc = fused_attn()
    dec_w1, dec_b1 = lin(D, (D, F)), lin(D, (1, F))
    dec_w2, dec_b2 = lin(F, (F, D)), lin(F, (1, D))
    dec_g1, dec_be1 = ones(), zeros()
    dec_g2, dec_be2 = ones(), zeros()
    dec_g3, dec_be3 = ones(), zeros()

    # --- embedding / time embedding / positional encoding / output ----------
    w_emb, b_emb = lin(INPUT_DIM, (INPUT_DIM, D)), lin(INPUT_DIM, (1, D))
    pos = jnp.zeros((1, D), jnp.float32)  # nn.Parameter(torch.zeros(1, d_model))
    time_emb = jax.random.normal(next(keys), (MAX_TIME, D), jnp.float32)
    w_out, b_out = lin(D, (D, OUTPUT_DIM)), lin(D, (1, OUTPUT_DIM))

    # --- pack into a few VMEM slabs (few DMA descriptors) -------------------
    w32 = jnp.concatenate(
        [w_emb, enc_wa, enc_w2, dec_ws, dec_wc, dec_w2], axis=0)      # (240, 32)
    w64 = jnp.concatenate([enc_w1, dec_w1], axis=0)                   # (64, 64)
    b32 = jnp.concatenate(
        [b_emb + pos,                      # 0  (pos folded into embed bias)
         enc_ba, enc_b2,                   # 1, 2
         enc_g1, enc_be1, enc_g2, enc_be2,  # 3..6
         dec_bs, dec_bc, dec_b2,           # 7, 8, 9
         dec_g1, dec_be1, dec_g2, dec_be2, dec_g3, dec_be3],          # 10..15
        axis=0)                                                       # (16, 32)
    b64 = jnp.concatenate([enc_b1, dec_b1], axis=0)                   # (2, 64)

    return {
        "time_emb": time_emb,
        "w32": w32, "w64": w64, "b32": b32, "b64": b64,
        "w_out": w_out, "b_out": b_out,
    }


# ----------------------------------- main -----------------------------------

if __name__ == "__main__":
    kx, kt = jax.random.split(jax.random.PRNGKey(0))
    x = jax.random.normal(kx, (BATCH, INPUT_DIM), jnp.float32)
    t = jax.random.randint(kt, (BATCH,), 0, MAX_TIME, dtype=jnp.int32)

    params = init_params(jax.random.PRNGKey(42))
    out = jax.block_until_ready(model_forward(params, x, t))

    assert out.shape == (BATCH, OUTPUT_DIM), out.shape
    assert bool(jnp.all(jnp.isfinite(out)))
    print("KERNEL_OK")
</pallas_src>

<mosaic_0001>
module attributes {stable_mosaic.version = 11 : i64} {
  func.func @_fused_forward_kernel(%arg0: i32, %arg1: memref<8x16xf32, #tpu.memory_space<vmem>>, %arg2: memref<8x1xi32, #tpu.memory_space<vmem>>, %arg3: memref<100x32xf32, #tpu.memory_space<vmem>>, %arg4: memref<240x32xf32, #tpu.memory_space<vmem>>, %arg5: memref<64x64xf32, #tpu.memory_space<vmem>>, %arg6: memref<32x16xf32, #tpu.memory_space<vmem>>, %arg7: memref<16x32xf32, #tpu.memory_space<vmem>>, %arg8: memref<2x64xf32, #tpu.memory_space<vmem>>, %arg9: memref<1x16xf32, #tpu.memory_space<vmem>>, %arg10: memref<8x16xf32, #tpu.memory_space<vmem>>) attributes {dimension_semantics = [#tpu.dimension_semantics<arbitrary>], iteration_bounds = array<i64: 1>, scalar_prefetch = 0 : i64, scratch_operands = 0 : i64, tpu.core_type = #tpu.core_type<tc>, window_params = [{pipeline_mode = #tpu.pipeline_mode<synchronous>, transform_indices = @transform_0, window_bounds = array<i64: 8, 16>}, {pipeline_mode = #tpu.pipeline_mode<synchronous>, transform_indices = @transform_1, window_bounds = array<i64: 8, 1>}, {pipeline_mode = #tpu.pipeline_mode<synchronous>, transform_indices = @transform_2, window_bounds = array<i64: 100, 32>}, {pipeline_mode = #tpu.pipeline_mode<synchronous>, transform_indices = @transform_3, window_bounds = array<i64: 240, 32>}, {pipeline_mode = #tpu.pipeline_mode<synchronous>, transform_indices = @transform_4, window_bounds = array<i64: 64, 64>}, {pipeline_mode = #tpu.pipeline_mode<synchronous>, transform_indices = @transform_5, window_bounds = array<i64: 32, 16>}, {pipeline_mode = #tpu.pipeline_mode<synchronous>, transform_indices = @transform_6, window_bounds = array<i64: 16, 32>}, {pipeline_mode = #tpu.pipeline_mode<synchronous>, transform_indices = @transform_7, window_bounds = array<i64: 2, 64>}, {pipeline_mode = #tpu.pipeline_mode<synchronous>, transform_indices = @transform_8, window_bounds = array<i64: 1, 16>}, {pipeline_mode = #tpu.pipeline_mode<synchronous>, transform_indices = @transform_9, window_bounds = array<i64: 8, 16>}]} {
    %0 = tpu.iota {dimensions = array<i32: 1>} : vector<8x100xi32>
    %c0 = arith.constant 0 : index
    %c0_0 = arith.constant 0 : index
    %1 = vector.load %arg2[%c0, %c0_0] : memref<8x1xi32, #tpu.memory_space<vmem>>, vector<8x1xi32>
    %2 = vector.broadcast %1 : vector<8x1xi32> to vector<8x100xi32>
    %3 = arith.cmpi eq, %0, %2 : vector<8x100xi32>
    %4 = arith.extui %3 : vector<8x100xi1> to vector<8x100xi32>
    %5 = arith.sitofp %4 : vector<8x100xi32> to vector<8x100xf32>
    %c0_1 = arith.constant 0 : index
    %c0_2 = arith.constant 0 : index
    %6 = vector.load %arg1[%c0_1, %c0_2] : memref<8x16xf32, #tpu.memory_space<vmem>>, vector<8x16xf32>
    %c0_3 = arith.constant 0 : index
    %c0_4 = arith.constant 0 : index
    %7 = vector.load %arg4[%c0_3, %c0_4] : memref<240x32xf32, #tpu.memory_space<vmem>>, vector<16x32xf32>
    %cst = arith.constant dense<0.000000e+00> : vector<8x32xf32>
    %8 = tpu.matmul %6, %7, %cst {dimension_numbers = #tpu.dot_dimension_numbers<[1], [0], [0], [1], [0, 0, 1, 1], [], []>} : vector<8x16xf32>, vector<16x32xf32>, vector<8x32xf32> -> vector<8x32xf32>
    %c0_5 = arith.constant 0 : index
    %c0_6 = arith.constant 0 : index
    %9 = vector.load %arg7[%c0_5, %c0_6] : memref<16x32xf32, #tpu.memory_space<vmem>>, vector<1x32xf32>
    %10 = vector.broadcast %9 : vector<1x32xf32> to vector<8x32xf32>
    %11 = arith.addf %8, %10 : vector<8x32xf32>
    %c0_7 = arith.constant 0 : index
    %c0_8 = arith.constant 0 : index
    %12 = vector.load %arg3[%c0_7, %c0_8] : memref<100x32xf32, #tpu.memory_space<vmem>>, vector<100x32xf32>
    %cst_9 = arith.constant dense<0.000000e+00> : vector<8x32xf32>
    %13 = tpu.matmul %5, %12, %cst_9 {dimension_numbers = #tpu.dot_dimension_numbers<[1], [0], [0], [1], [0, 0, 1, 1], [], []>} : vector<8x100xf32>, vector<100x32xf32>, vector<8x32xf32> -> vector<8x32xf32>
    %14 = arith.addf %11, %13 : vector<8x32xf32>
    %c16 = arith.constant 16 : index
    %c0_10 = arith.constant 0 : index
    %15 = vector.load %arg4[%c16, %c0_10] : memref<240x32xf32, #tpu.memory_space<vmem>>, vector<32x32xf32>
    %c0_11 = arith.constant 0 : index
    %c0_12 = arith.constant 0 : index
    %16 = vector.load %arg5[%c0_11, %c0_12] : memref<64x64xf32, #tpu.memory_space<vmem>>, vector<32x64xf32>
    %c48 = arith.constant 48 : index
    %c0_13 = arith.constant 0 : index
    %17 = vector.load %arg4[%c48, %c0_13] : memref<240x32xf32, #tpu.memory_space<vmem>>, vector<64x32xf32>
    %cst_14 = arith.constant dense<0.000000e+00> : vector<8x32xf32>
    %18 = tpu.matmul %14, %15, %cst_14 {dimension_numbers = #tpu.dot_dimension_numbers<[1], [0], [0], [1], [0, 0, 1, 1], [], []>} : vector<8x32xf32>, vector<32x32xf32>, vector<8x32xf32> -> vector<8x32xf32>
    %c1 = arith.constant 1 : index
    %c0_15 = arith.constant 0 : index
    %19 = vector.load %arg7[%c1, %c0_15] : memref<16x32xf32, #tpu.memory_space<vmem>>, vector<1x32xf32>
    %20 = vector.broadcast %19 : vector<1x32xf32> to vector<8x32xf32>
    %21 = arith.addf %18, %20 : vector<8x32xf32>
    %22 = arith.addf %14, %21 : vector<8x32xf32>
    %c3 = arith.constant 3 : index
    %c0_16 = arith.constant 0 : index
    %23 = vector.load %arg7[%c3, %c0_16] : memref<16x32xf32, #tpu.memory_space<vmem>>, vector<1x32xf32>
    %c4 = arith.constant 4 : index
    %c0_17 = arith.constant 0 : index
    %24 = vector.load %arg7[%c4, %c0_17] : memref<16x32xf32, #tpu.memory_space<vmem>>, vector<1x32xf32>
    %cst_18 = arith.constant dense<0.000000e+00> : vector<8xf32>
    %25 = vector.multi_reduction <add>, %22, %cst_18 [1] : vector<8x32xf32> to vector<8xf32>
    %26 = vector.shape_cast %25 : vector<8xf32> to vector<8x1xf32>
    %cst_19 = arith.constant 3.200000e+01 : f32
    %27 = vector.broadcast %cst_19 : f32 to vector<8x1xf32>
    %28 = arith.divf %26, %27 : vector<8x1xf32>
    %29 = vector.broadcast %28 : vector<8x1xf32> to vector<8x32xf32>
    %30 = arith.subf %22, %29 : vector<8x32xf32>
    %31 = arith.mulf %30, %30 : vector<8x32xf32>
    %cst_20 = arith.constant dense<0.000000e+00> : vector<8xf32>
    %32 = vector.multi_reduction <add>, %31, %cst_20 [1] : vector<8x32xf32> to vector<8xf32>
    %33 = vector.shape_cast %32 : vector<8xf32> to vector<8x1xf32>
    %cst_21 = arith.constant 3.200000e+01 : f32
    %34 = vector.broadcast %cst_21 : f32 to vector<8x1xf32>
    %35 = arith.divf %33, %34 : vector<8x1xf32>
    %36 = vector.broadcast %28 : vector<8x1xf32> to vector<8x32xf32>
    %37 = arith.subf %22, %36 : vector<8x32xf32>
    %cst_22 = arith.constant 9.99999974E-6 : f32
    %38 = vector.broadcast %cst_22 : f32 to vector<8x1xf32>
    %39 = arith.addf %35, %38 : vector<8x1xf32>
    %40 = math.rsqrt %39 : vector<8x1xf32>
    %41 = vector.broadcast %40 : vector<8x1xf32> to vector<8x32xf32>
    %42 = arith.mulf %37, %41 : vector<8x32xf32>
    %43 = vector.broadcast %23 : vector<1x32xf32> to vector<8x32xf32>
    %44 = arith.mulf %42, %43 : vector<8x32xf32>
    %45 = vector.broadcast %24 : vector<1x32xf32> to vector<8x32xf32>
    %46 = arith.addf %44, %45 : vector<8x32xf32>
    %cst_23 = arith.constant dense<0.000000e+00> : vector<8x64xf32>
    %47 = tpu.matmul %46, %16, %cst_23 {dimension_numbers = #tpu.dot_dimension_numbers<[1], [0], [0], [1], [0, 0, 1, 1], [], []>} : vector<8x32xf32>, vector<32x64xf32>, vector<8x64xf32> -> vector<8x64xf32>
    %c0_24 = arith.constant 0 : index
    %c0_25 = arith.constant 0 : index
    %48 = vector.load %arg8[%c0_24, %c0_25] : memref<2x64xf32, #tpu.memory_space<vmem>>, vector<1x64xf32>
    %49 = vector.broadcast %48 : vector<1x64xf32> to vector<8x64xf32>
    %50 = arith.addf %47, %49 : vector<8x64xf32>
    %cst_26 = arith.constant 0.000000e+00 : f32
    %51 = vector.broadcast %cst_26 : f32 to vector<8x64xf32>
    %52 = arith.maximumf %50, %51 : vector<8x64xf32>
    %cst_27 = arith.constant dense<0.000000e+00> : vector<8x32xf32>
    %53 = tpu.matmul %52, %17, %cst_27 {dimension_numbers = #tpu.dot_dimension_numbers<[1], [0], [0], [1], [0, 0, 1, 1], [], []>} : vector<8x64xf32>, vector<64x32xf32>, vector<8x32xf32> -> vector<8x32xf32>
    %c2 = arith.constant 2 : index
    %c0_28 = arith.constant 0 : index
    %54 = vector.load %arg7[%c2, %c0_28] : memref<16x32xf32, #tpu.memory_space<vmem>>, vector<1x32xf32>
    %55 = vector.broadcast %54 : vector<1x32xf32> to vector<8x32xf32>
    %56 = arith.addf %53, %55 : vector<8x32xf32>
    %57 = arith.addf %46, %56 : vector<8x32xf32>
    %c5 = arith.constant 5 : index
    %c0_29 = arith.constant 0 : index
    %58 = vector.load %arg7[%c5, %c0_29] : memref<16x32xf32, #tpu.memory_space<vmem>>, vector<1x32xf32>
    %c6 = arith.constant 6 : index
    %c0_30 = arith.constant 0 : index
    %59 = vector.load %arg7[%c6, %c0_30] : memref<16x32xf32, #tpu.memory_space<vmem>>, vector<1x32xf32>
    %cst_31 = arith.constant dense<0.000000e+00> : vector<8xf32>
    %60 = vector.multi_reduction <add>, %57, %cst_31 [1] : vector<8x32xf32> to vector<8xf32>
    %61 = vector.shape_cast %60 : vector<8xf32> to vector<8x1xf32>
    %cst_32 = arith.constant 3.200000e+01 : f32
    %62 = vector.broadcast %cst_32 : f32 to vector<8x1xf32>
    %63 = arith.divf %61, %62 : vector<8x1xf32>
    %64 = vector.broadcast %63 : vector<8x1xf32> to vector<8x32xf32>
    %65 = arith.subf %57, %64 : vector<8x32xf32>
    %66 = arith.mulf %65, %65 : vector<8x32xf32>
    %cst_33 = arith.constant dense<0.000000e+00> : vector<8xf32>
    %67 = vector.multi_reduction <add>, %66, %cst_33 [1] : vector<8x32xf32> to vector<8xf32>
    %68 = vector.shape_cast %67 : vector<8xf32> to vector<8x1xf32>
    %cst_34 = arith.constant 3.200000e+01 : f32
    %69 = vector.broadcast %cst_34 : f32 to vector<8x1xf32>
    %70 = arith.divf %68, %69 : vector<8x1xf32>
    %71 = vector.broadcast %63 : vector<8x1xf32> to vector<8x32xf32>
    %72 = arith.subf %57, %71 : vector<8x32xf32>
    %cst_35 = arith.constant 9.99999974E-6 : f32
    %73 = vector.broadcast %cst_35 : f32 to vector<8x1xf32>
    %74 = arith.addf %70, %73 : vector<8x1xf32>
    %75 = math.rsqrt %74 : vector<8x1xf32>
    %76 = vector.broadcast %75 : vector<8x1xf32> to vector<8x32xf32>
    %77 = arith.mulf %72, %76 : vector<8x32xf32>
    %78 = vector.broadcast %58 : vector<1x32xf32> to vector<8x32xf32>
    %79 = arith.mulf %77, %78 : vector<8x32xf32>
    %80 = vector.broadcast %59 : vector<1x32xf32> to vector<8x32xf32>
    %81 = arith.addf %79, %80 : vector<8x32xf32>
    %cst_36 = arith.constant dense<0.000000e+00> : vector<8x32xf32>
    %82 = tpu.matmul %81, %15, %cst_36 {dimension_numbers = #tpu.dot_dimension_numbers<[1], [0], [0], [1], [0, 0, 1, 1], [], []>} : vector<8x32xf32>, vector<32x32xf32>, vector<8x32xf32> -> vector<8x32xf32>
    %c1_37 = arith.constant 1 : index
    %c0_38 = arith.constant 0 : index
    %83 = vector.load %arg7[%c1_37, %c0_38] : memref<16x32xf32, #tpu.memory_space<vmem>>, vector<1x32xf32>
    %84 = vector.broadcast %83 : vector<1x32xf32> to vector<8x32xf32>
    %85 = arith.addf %82, %84 : vector<8x32xf32>
    %86 = arith.addf %81, %85 : vector<8x32xf32>
    %c3_39 = arith.constant 3 : index
    %c0_40 = arith.constant 0 : index
    %87 = vector.load %arg7[%c3_39, %c0_40] : memref<16x32xf32, #tpu.memory_space<vmem>>, vector<1x32xf32>
    %c4_41 = arith.constant 4 : index
    %c0_42 = arith.constant 0 : index
    %88 = vector.load %arg7[%c4_41, %c0_42] : memref<16x32xf32, #tpu.memory_space<vmem>>, vector<1x32xf32>
    %cst_43 = arith.constant dense<0.000000e+00> : vector<8xf32>
    %89 = vector.multi_reduction <add>, %86, %cst_43 [1] : vector<8x32xf32> to vector<8xf32>
    %90 = vector.shape_cast %89 : vector<8xf32> to vector<8x1xf32>
    %cst_44 = arith.constant 3.200000e+01 : f32
    %91 = vector.broadcast %cst_44 : f32 to vector<8x1xf32>
    %92 = arith.divf %90, %91 : vector<8x1xf32>
    %93 = vector.broadcast %92 : vector<8x1xf32> to vector<8x32xf32>
    %94 = arith.subf %86, %93 : vector<8x32xf32>
    %95 = arith.mulf %94, %94 : vector<8x32xf32>
    %cst_45 = arith.constant dense<0.000000e+00> : vector<8xf32>
    %96 = vector.multi_reduction <add>, %95, %cst_45 [1] : vector<8x32xf32> to vector<8xf32>
    %97 = vector.shape_cast %96 : vector<8xf32> to vector<8x1xf32>
    %cst_46 = arith.constant 3.200000e+01 : f32
    %98 = vector.broadcast %cst_46 : f32 to vector<8x1xf32>
    %99 = arith.divf %97, %98 : vector<8x1xf32>
    %100 = vector.broadcast %92 : vector<8x1xf32> to vector<8x32xf32>
    %101 = arith.subf %86, %100 : vector<8x32xf32>
    %cst_47 = arith.constant 9.99999974E-6 : f32
    %102 = vector.broadcast %cst_47 : f32 to vector<8x1xf32>
    %103 = arith.addf %99, %102 : vector<8x1xf32>
    %104 = math.rsqrt %103 : vector<8x1xf32>
    %105 = vector.broadcast %104 : vector<8x1xf32> to vector<8x32xf32>
    %106 = arith.mulf %101, %105 : vector<8x32xf32>
    %107 = vector.broadcast %87 : vector<1x32xf32> to vector<8x32xf32>
    %108 = arith.mulf %106, %107 : vector<8x32xf32>
    %109 = vector.broadcast %88 : vector<1x32xf32> to vector<8x32xf32>
    %110 = arith.addf %108, %109 : vector<8x32xf32>
    %cst_48 = arith.constant dense<0.000000e+00> : vector<8x64xf32>
    %111 = tpu.matmul %110, %16, %cst_48 {dimension_numbers = #tpu.dot_dimension_numbers<[1], [0], [0], [1], [0, 0, 1, 1], [], []>} : vector<8x32xf32>, vector<32x64xf32>, vector<8x64xf32> -> vector<8x64xf32>
    %c0_49 = arith.constant 0 : index
    %c0_50 = arith.constant 0 : index
    %112 = vector.load %arg8[%c0_49, %c0_50] : memref<2x64xf32, #tpu.memory_space<vmem>>, vector<1x64xf32>
    %113 = vector.broadcast %112 : vector<1x64xf32> to vector<8x64xf32>
    %114 = arith.addf %111, %113 : vector<8x64xf32>
    %cst_51 = arith.constant 0.000000e+00 : f32
    %115 = vector.broadcast %cst_51 : f32 to vector<8x64xf32>
    %116 = arith.maximumf %114, %115 : vector<8x64xf32>
    %cst_52 = arith.constant dense<0.000000e+00> : vector<8x32xf32>
    %117 = tpu.matmul %116, %17, %cst_52 {dimension_numbers = #tpu.dot_dimension_numbers<[1], [0], [0], [1], [0, 0, 1, 1], [], []>} : vector<8x64xf32>, vector<64x32xf32>, vector<8x32xf32> -> vector<8x32xf32>
    %c2_53 = arith.constant 2 : index
    %c0_54 = arith.constant 0 : index
    %118 = vector.load %arg7[%c2_53, %c0_54] : memref<16x32xf32, #tpu.memory_space<vmem>>, vector<1x32xf32>
    %119 = vector.broadcast %118 : vector<1x32xf32> to vector<8x32xf32>
    %120 = arith.addf %117, %119 : vector<8x32xf32>
    %121 = arith.addf %110, %120 : vector<8x32xf32>
    %c5_55 = arith.constant 5 : index
    %c0_56 = arith.constant 0 : index
    %122 = vector.load %arg7[%c5_55, %c0_56] : memref<16x32xf32, #tpu.memory_space<vmem>>, vector<1x32xf32>
    %c6_57 = arith.constant 6 : index
    %c0_58 = arith.constant 0 : index
    %123 = vector.load %arg7[%c6_57, %c0_58] : memref<16x32xf32, #tpu.memory_space<vmem>>, vector<1x32xf32>
    %cst_59 = arith.constant dense<0.000000e+00> : vector<8xf32>
    %124 = vector.multi_reduction <add>, %121, %cst_59 [1] : vector<8x32xf32> to vector<8xf32>
    %125 = vector.shape_cast %124 : vector<8xf32> to vector<8x1xf32>
    %cst_60 = arith.constant 3.200000e+01 : f32
    %126 = vector.broadcast %cst_60 : f32 to vector<8x1xf32>
    %127 = arith.divf %125, %126 : vector<8x1xf32>
    %128 = vector.broadcast %127 : vector<8x1xf32> to vector<8x32xf32>
    %129 = arith.subf %121, %128 : vector<8x32xf32>
    %130 = arith.mulf %129, %129 : vector<8x32xf32>
    %cst_61 = arith.constant dense<0.000000e+00> : vector<8xf32>
    %131 = vector.multi_reduction <add>, %130, %cst_61 [1] : vector<8x32xf32> to vector<8xf32>
    %132 = vector.shape_cast %131 : vector<8xf32> to vector<8x1xf32>
    %cst_62 = arith.constant 3.200000e+01 : f32
    %133 = vector.broadcast %cst_62 : f32 to vector<8x1xf32>
    %134 = arith.divf %132, %133 : vector<8x1xf32>
    %135 = vector.broadcast %127 : vector<8x1xf32> to vector<8x32xf32>
    %136 = arith.subf %121, %135 : vector<8x32xf32>
    %cst_63 = arith.constant 9.99999974E-6 : f32
    %137 = vector.broadcast %cst_63 : f32 to vector<8x1xf32>
    %138 = arith.addf %134, %137 : vector<8x1xf32>
    %139 = math.rsqrt %138 : vector<8x1xf32>
    %140 = vector.broadcast %139 : vector<8x1xf32> to vector<8x32xf32>
    %141 = arith.mulf %136, %140 : vector<8x32xf32>
    %142 = vector.broadcast %122 : vector<1x32xf32> to vector<8x32xf32>
    %143 = arith.mulf %141, %142 : vector<8x32xf32>
    %144 = vector.broadcast %123 : vector<1x32xf32> to vector<8x32xf32>
    %145 = arith.addf %143, %144 : vector<8x32xf32>
    %c112 = arith.constant 112 : index
    %c0_64 = arith.constant 0 : index
    %146 = vector.load %arg4[%c112, %c0_64] : memref<240x32xf32, #tpu.memory_space<vmem>>, vector<32x32xf32>
    %c144 = arith.constant 144 : index
    %c0_65 = arith.constant 0 : index
    %147 = vector.load %arg4[%c144, %c0_65] : memref<240x32xf32, #tpu.memory_space<vmem>>, vector<32x32xf32>
    %c32 = arith.constant 32 : index
    %c0_66 = arith.constant 0 : index
    %148 = vector.load %arg5[%c32, %c0_66] : memref<64x64xf32, #tpu.memory_space<vmem>>, vector<32x64xf32>
    %c176 = arith.constant 176 : index
    %c0_67 = arith.constant 0 : index
    %149 = vector.load %arg4[%c176, %c0_67] : memref<240x32xf32, #tpu.memory_space<vmem>>, vector<64x32xf32>
    %cst_68 = arith.constant dense<0.000000e+00> : vector<8x32xf32>
    %150 = tpu.matmul %145, %146, %cst_68 {dimension_numbers = #tpu.dot_dimension_numbers<[1], [0], [0], [1], [0, 0, 1, 1], [], []>} : vector<8x32xf32>, vector<32x32xf32>, vector<8x32xf32> -> vector<8x32xf32>
    %c7 = arith.constant 7 : index
    %c0_69 = arith.constant 0 : index
    %151 = vector.load %arg7[%c7, %c0_69] : memref<16x32xf32, #tpu.memory_space<vmem>>, vector<1x32xf32>
    %152 = vector.broadcast %151 : vector<1x32xf32> to vector<8x32xf32>
    %153 = arith.addf %150, %152 : vector<8x32xf32>
    %154 = arith.addf %145, %153 : vector<8x32xf32>
    %c10 = arith.constant 10 : index
    %c0_70 = arith.constant 0 : index
    %155 = vector.load %arg7[%c10, %c0_70] : memref<16x32xf32, #tpu.memory_space<vmem>>, vector<1x32xf32>
    %c11 = arith.constant 11 : index
    %c0_71 = arith.constant 0 : index
    %156 = vector.load %arg7[%c11, %c0_71] : memref<16x32xf32, #tpu.memory_space<vmem>>, vector<1x32xf32>
    %cst_72 = arith.constant dense<0.000000e+00> : vector<8xf32>
    %157 = vector.multi_reduction <add>, %154, %cst_72 [1] : vector<8x32xf32> to vector<8xf32>
    %158 = vector.shape_cast %157 : vector<8xf32> to vector<8x1xf32>
    %cst_73 = arith.constant 3.200000e+01 : f32
    %159 = vector.broadcast %cst_73 : f32 to vector<8x1xf32>
    %160 = arith.divf %158, %159 : vector<8x1xf32>
    %161 = vector.broadcast %160 : vector<8x1xf32> to vector<8x32xf32>
    %162 = arith.subf %154, %161 : vector<8x32xf32>
    %163 = arith.mulf %162, %162 : vector<8x32xf32>
    %cst_74 = arith.constant dense<0.000000e+00> : vector<8xf32>
    %164 = vector.multi_reduction <add>, %163, %cst_74 [1] : vector<8x32xf32> to vector<8xf32>
    %165 = vector.shape_cast %164 : vector<8xf32> to vector<8x1xf32>
    %cst_75 = arith.constant 3.200000e+01 : f32
    %166 = vector.broadcast %cst_75 : f32 to vector<8x1xf32>
    %167 = arith.divf %165, %166 : vector<8x1xf32>
    %168 = vector.broadcast %160 : vector<8x1xf32> to vector<8x32xf32>
    %169 = arith.subf %154, %168 : vector<8x32xf32>
    %cst_76 = arith.constant 9.99999974E-6 : f32
    %170 = vector.broadcast %cst_76 : f32 to vector<8x1xf32>
    %171 = arith.addf %167, %170 : vector<8x1xf32>
    %172 = math.rsqrt %171 : vector<8x1xf32>
    %173 = vector.broadcast %172 : vector<8x1xf32> to vector<8x32xf32>
    %174 = arith.mulf %169, %173 : vector<8x32xf32>
    %175 = vector.broadcast %155 : vector<1x32xf32> to vector<8x32xf32>
    %176 = arith.mulf %174, %175 : vector<8x32xf32>
    %177 = vector.broadcast %156 : vector<1x32xf32> to vector<8x32xf32>
    %178 = arith.addf %176, %177 : vector<8x32xf32>
    %cst_77 = arith.constant dense<0.000000e+00> : vector<8x32xf32>
    %179 = tpu.matmul %178, %147, %cst_77 {dimension_numbers = #tpu.dot_dimension_numbers<[1], [0], [0], [1], [0, 0, 1, 1], [], []>} : vector<8x32xf32>, vector<32x32xf32>, vector<8x32xf32> -> vector<8x32xf32>
    %c8 = arith.constant 8 : index
    %c0_78 = arith.constant 0 : index
    %180 = vector.load %arg7[%c8, %c0_78] : memref<16x32xf32, #tpu.memory_space<vmem>>, vector<1x32xf32>
    %181 = vector.broadcast %180 : vector<1x32xf32> to vector<8x32xf32>
    %182 = arith.addf %179, %181 : vector<8x32xf32>
    %183 = arith.addf %178, %182 : vector<8x32xf32>
    %c12 = arith.constant 12 : index
    %c0_79 = arith.constant 0 : index
    %184 = vector.load %arg7[%c12, %c0_79] : memref<16x32xf32, #tpu.memory_space<vmem>>, vector<1x32xf32>
    %c13 = arith.constant 13 : index
    %c0_80 = arith.constant 0 : index
    %185 = vector.load %arg7[%c13, %c0_80] : memref<16x32xf32, #tpu.memory_space<vmem>>, vector<1x32xf32>
    %cst_81 = arith.constant dense<0.000000e+00> : vector<8xf32>
    %186 = vector.multi_reduction <add>, %183, %cst_81 [1] : vector<8x32xf32> to vector<8xf32>
    %187 = vector.shape_cast %186 : vector<8xf32> to vector<8x1xf32>
    %cst_82 = arith.constant 3.200000e+01 : f32
    %188 = vector.broadcast %cst_82 : f32 to vector<8x1xf32>
    %189 = arith.divf %187, %188 : vector<8x1xf32>
    %190 = vector.broadcast %189 : vector<8x1xf32> to vector<8x32xf32>
    %191 = arith.subf %183, %190 : vector<8x32xf32>
    %192 = arith.mulf %191, %191 : vector<8x32xf32>
    %cst_83 = arith.constant dense<0.000000e+00> : vector<8xf32>
    %193 = vector.multi_reduction <add>, %192, %cst_83 [1] : vector<8x32xf32> to vector<8xf32>
    %194 = vector.shape_cast %193 : vector<8xf32> to vector<8x1xf32>
    %cst_84 = arith.constant 3.200000e+01 : f32
    %195 = vector.broadcast %cst_84 : f32 to vector<8x1xf32>
    %196 = arith.divf %194, %195 : vector<8x1xf32>
    %197 = vector.broadcast %189 : vector<8x1xf32> to vector<8x32xf32>
    %198 = arith.subf %183, %197 : vector<8x32xf32>
    %cst_85 = arith.constant 9.99999974E-6 : f32
    %199 = vector.broadcast %cst_85 : f32 to vector<8x1xf32>
    %200 = arith.addf %196, %199 : vector<8x1xf32>
    %201 = math.rsqrt %200 : vector<8x1xf32>
    %202 = vector.broadcast %201 : vector<8x1xf32> to vector<8x32xf32>
    %203 = arith.mulf %198, %202 : vector<8x32xf32>
    %204 = vector.broadcast %184 : vector<1x32xf32> to vector<8x32xf32>
    %205 = arith.mulf %203, %204 : vector<8x32xf32>
    %206 = vector.broadcast %185 : vector<1x32xf32> to vector<8x32xf32>
    %207 = arith.addf %205, %206 : vector<8x32xf32>
    %cst_86 = arith.constant dense<0.000000e+00> : vector<8x64xf32>
    %208 = tpu.matmul %207, %148, %cst_86 {dimension_numbers = #tpu.dot_dimension_numbers<[1], [0], [0], [1], [0, 0, 1, 1], [], []>} : vector<8x32xf32>, vector<32x64xf32>, vector<8x64xf32> -> vector<8x64xf32>
    %c1_87 = arith.constant 1 : index
    %c0_88 = arith.constant 0 : index
    %209 = vector.load %arg8[%c1_87, %c0_88] : memref<2x64xf32, #tpu.memory_space<vmem>>, vector<1x64xf32>
    %210 = vector.broadcast %209 : vector<1x64xf32> to vector<8x64xf32>
    %211 = arith.addf %208, %210 : vector<8x64xf32>
    %cst_89 = arith.constant 0.000000e+00 : f32
    %212 = vector.broadcast %cst_89 : f32 to vector<8x64xf32>
    %213 = arith.maximumf %211, %212 : vector<8x64xf32>
    %cst_90 = arith.constant dense<0.000000e+00> : vector<8x32xf32>
    %214 = tpu.matmul %213, %149, %cst_90 {dimension_numbers = #tpu.dot_dimension_numbers<[1], [0], [0], [1], [0, 0, 1, 1], [], []>} : vector<8x64xf32>, vector<64x32xf32>, vector<8x32xf32> -> vector<8x32xf32>
    %c9 = arith.constant 9 : index
    %c0_91 = arith.constant 0 : index
    %215 = vector.load %arg7[%c9, %c0_91] : memref<16x32xf32, #tpu.memory_space<vmem>>, vector<1x32xf32>
    %216 = vector.broadcast %215 : vector<1x32xf32> to vector<8x32xf32>
    %217 = arith.addf %214, %216 : vector<8x32xf32>
    %218 = arith.addf %207, %217 : vector<8x32xf32>
    %c14 = arith.constant 14 : index
    %c0_92 = arith.constant 0 : index
    %219 = vector.load %arg7[%c14, %c0_92] : memref<16x32xf32, #tpu.memory_space<vmem>>, vector<1x32xf32>
    %c15 = arith.constant 15 : index
    %c0_93 = arith.constant 0 : index
    %220 = vector.load %arg7[%c15, %c0_93] : memref<16x32xf32, #tpu.memory_space<vmem>>, vector<1x32xf32>
    %cst_94 = arith.constant dense<0.000000e+00> : vector<8xf32>
    %221 = vector.multi_reduction <add>, %218, %cst_94 [1] : vector<8x32xf32> to vector<8xf32>
    %222 = vector.shape_cast %221 : vector<8xf32> to vector<8x1xf32>
    %cst_95 = arith.constant 3.200000e+01 : f32
    %223 = vector.broadcast %cst_95 : f32 to vector<8x1xf32>
    %224 = arith.divf %222, %223 : vector<8x1xf32>
    %225 = vector.broadcast %224 : vector<8x1xf32> to vector<8x32xf32>
    %226 = arith.subf %218, %225 : vector<8x32xf32>
    %227 = arith.mulf %226, %226 : vector<8x32xf32>
    %cst_96 = arith.constant dense<0.000000e+00> : vector<8xf32>
    %228 = vector.multi_reduction <add>, %227, %cst_96 [1] : vector<8x32xf32> to vector<8xf32>
    %229 = vector.shape_cast %228 : vector<8xf32> to vector<8x1xf32>
    %cst_97 = arith.constant 3.200000e+01 : f32
    %230 = vector.broadcast %cst_97 : f32 to vector<8x1xf32>
    %231 = arith.divf %229, %230 : vector<8x1xf32>
    %232 = vector.broadcast %224 : vector<8x1xf32> to vector<8x32xf32>
    %233 = arith.subf %218, %232 : vector<8x32xf32>
    %cst_98 = arith.constant 9.99999974E-6 : f32
    %234 = vector.broadcast %cst_98 : f32 to vector<8x1xf32>
    %235 = arith.addf %231, %234 : vector<8x1xf32>
    %236 = math.rsqrt %235 : vector<8x1xf32>
    %237 = vector.broadcast %236 : vector<8x1xf32> to vector<8x32xf32>
    %238 = arith.mulf %233, %237 : vector<8x32xf32>
    %239 = vector.broadcast %219 : vector<1x32xf32> to vector<8x32xf32>
    %240 = arith.mulf %238, %239 : vector<8x32xf32>
    %241 = vector.broadcast %220 : vector<1x32xf32> to vector<8x32xf32>
    %242 = arith.addf %240, %241 : vector<8x32xf32>
    %cst_99 = arith.constant dense<0.000000e+00> : vector<8x32xf32>
    %243 = tpu.matmul %242, %146, %cst_99 {dimension_numbers = #tpu.dot_dimension_numbers<[1], [0], [0], [1], [0, 0, 1, 1], [], []>} : vector<8x32xf32>, vector<32x32xf32>, vector<8x32xf32> -> vector<8x32xf32>
    %c7_100 = arith.constant 7 : index
    %c0_101 = arith.constant 0 : index
    %244 = vector.load %arg7[%c7_100, %c0_101] : memref<16x32xf32, #tpu.memory_space<vmem>>, vector<1x32xf32>
    %245 = vector.broadcast %244 : vector<1x32xf32> to vector<8x32xf32>
    %246 = arith.addf %243, %245 : vector<8x32xf32>
    %247 = arith.addf %242, %246 : vector<8x32xf32>
    %c10_102 = arith.constant 10 : index
    %c0_103 = arith.constant 0 : index
    %248 = vector.load %arg7[%c10_102, %c0_103] : memref<16x32xf32, #tpu.memory_space<vmem>>, vector<1x32xf32>
    %c11_104 = arith.constant 11 : index
    %c0_105 = arith.constant 0 : index
    %249 = vector.load %arg7[%c11_104, %c0_105] : memref<16x32xf32, #tpu.memory_space<vmem>>, vector<1x32xf32>
    %cst_106 = arith.constant dense<0.000000e+00> : vector<8xf32>
    %250 = vector.multi_reduction <add>, %247, %cst_106 [1] : vector<8x32xf32> to vector<8xf32>
    %251 = vector.shape_cast %250 : vector<8xf32> to vector<8x1xf32>
    %cst_107 = arith.constant 3.200000e+01 : f32
    %252 = vector.broadcast %cst_107 : f32 to vector<8x1xf32>
    %253 = arith.divf %251, %252 : vector<8x1xf32>
    %254 = vector.broadcast %253 : vector<8x1xf32> to vector<8x32xf32>
    %255 = arith.subf %247, %254 : vector<8x32xf32>
    %256 = arith.mulf %255, %255 : vector<8x32xf32>
    %cst_108 = arith.constant dense<0.000000e+00> : vector<8xf32>
    %257 = vector.multi_reduction <add>, %256, %cst_108 [1] : vector<8x32xf32> to vector<8xf32>
    %258 = vector.shape_cast %257 : vector<8xf32> to vector<8x1xf32>
    %cst_109 = arith.constant 3.200000e+01 : f32
    %259 = vector.broadcast %cst_109 : f32 to vector<8x1xf32>
    %260 = arith.divf %258, %259 : vector<8x1xf32>
    %261 = vector.broadcast %253 : vector<8x1xf32> to vector<8x32xf32>
    %262 = arith.subf %247, %261 : vector<8x32xf32>
    %cst_110 = arith.constant 9.99999974E-6 : f32
    %263 = vector.broadcast %cst_110 : f32 to vector<8x1xf32>
    %264 = arith.addf %260, %263 : vector<8x1xf32>
    %265 = math.rsqrt %264 : vector<8x1xf32>
    %266 = vector.broadcast %265 : vector<8x1xf32> to vector<8x32xf32>
    %267 = arith.mulf %262, %266 : vector<8x32xf32>
    %268 = vector.broadcast %248 : vector<1x32xf32> to vector<8x32xf32>
    %269 = arith.mulf %267, %268 : vector<8x32xf32>
    %270 = vector.broadcast %249 : vector<1x32xf32> to vector<8x32xf32>
    %271 = arith.addf %269, %270 : vector<8x32xf32>
    %cst_111 = arith.constant dense<0.000000e+00> : vector<8x32xf32>
    %272 = tpu.matmul %271, %147, %cst_111 {dimension_numbers = #tpu.dot_dimension_numbers<[1], [0], [0], [1], [0, 0, 1, 1], [], []>} : vector<8x32xf32>, vector<32x32xf32>, vector<8x32xf32> -> vector<8x32xf32>
    %c8_112 = arith.constant 8 : index
    %c0_113 = arith.constant 0 : index
    %273 = vector.load %arg7[%c8_112, %c0_113] : memref<16x32xf32, #tpu.memory_space<vmem>>, vector<1x32xf32>
    %274 = vector.broadcast %273 : vector<1x32xf32> to vector<8x32xf32>
    %275 = arith.addf %272, %274 : vector<8x32xf32>
    %276 = arith.addf %271, %275 : vector<8x32xf32>
    %c12_114 = arith.constant 12 : index
    %c0_115 = arith.constant 0 : index
    %277 = vector.load %arg7[%c12_114, %c0_115] : memref<16x32xf32, #tpu.memory_space<vmem>>, vector<1x32xf32>
    %c13_116 = arith.constant 13 : index
    %c0_117 = arith.constant 0 : index
    %278 = vector.load %arg7[%c13_116, %c0_117] : memref<16x32xf32, #tpu.memory_space<vmem>>, vector<1x32xf32>
    %cst_118 = arith.constant dense<0.000000e+00> : vector<8xf32>
    %279 = vector.multi_reduction <add>, %276, %cst_118 [1] : vector<8x32xf32> to vector<8xf32>
    %280 = vector.shape_cast %279 : vector<8xf32> to vector<8x1xf32>
    %cst_119 = arith.constant 3.200000e+01 : f32
    %281 = vector.broadcast %cst_119 : f32 to vector<8x1xf32>
    %282 = arith.divf %280, %281 : vector<8x1xf32>
    %283 = vector.broadcast %282 : vector<8x1xf32> to vector<8x32xf32>
    %284 = arith.subf %276, %283 : vector<8x32xf32>
    %285 = arith.mulf %284, %284 : vector<8x32xf32>
    %cst_120 = arith.constant dense<0.000000e+00> : vector<8xf32>
    %286 = vector.multi_reduction <add>, %285, %cst_120 [1] : vector<8x32xf32> to vector<8xf32>
    %287 = vector.shape_cast %286 : vector<8xf32> to vector<8x1xf32>
    %cst_121 = arith.constant 3.200000e+01 : f32
    %288 = vector.broadcast %cst_121 : f32 to vector<8x1xf32>
    %289 = arith.divf %287, %288 : vector<8x1xf32>
    %290 = vector.broadcast %282 : vector<8x1xf32> to vector<8x32xf32>
    %291 = arith.subf %276, %290 : vector<8x32xf32>
    %cst_122 = arith.constant 9.99999974E-6 : f32
    %292 = vector.broadcast %cst_122 : f32 to vector<8x1xf32>
    %293 = arith.addf %289, %292 : vector<8x1xf32>
    %294 = math.rsqrt %293 : vector<8x1xf32>
    %295 = vector.broadcast %294 : vector<8x1xf32> to vector<8x32xf32>
    %296 = arith.mulf %291, %295 : vector<8x32xf32>
    %297 = vector.broadcast %277 : vector<1x32xf32> to vector<8x32xf32>
    %298 = arith.mulf %296, %297 : vector<8x32xf32>
    %299 = vector.broadcast %278 : vector<1x32xf32> to vector<8x32xf32>
    %300 = arith.addf %298, %299 : vector<8x32xf32>
    %cst_123 = arith.constant dense<0.000000e+00> : vector<8x64xf32>
    %301 = tpu.matmul %300, %148, %cst_123 {dimension_numbers = #tpu.dot_dimension_numbers<[1], [0], [0], [1], [0, 0, 1, 1], [], []>} : vector<8x32xf32>, vector<32x64xf32>, vector<8x64xf32> -> vector<8x64xf32>
    %c1_124 = arith.constant 1 : index
    %c0_125 = arith.constant 0 : index
    %302 = vector.load %arg8[%c1_124, %c0_125] : memref<2x64xf32, #tpu.memory_space<vmem>>, vector<1x64xf32>
    %303 = vector.broadcast %302 : vector<1x64xf32> to vector<8x64xf32>
    %304 = arith.addf %301, %303 : vector<8x64xf32>
    %cst_126 = arith.constant 0.000000e+00 : f32
    %305 = vector.broadcast %cst_126 : f32 to vector<8x64xf32>
    %306 = arith.maximumf %304, %305 : vector<8x64xf32>
    %cst_127 = arith.constant dense<0.000000e+00> : vector<8x32xf32>
    %307 = tpu.matmul %306, %149, %cst_127 {dimension_numbers = #tpu.dot_dimension_numbers<[1], [0], [0], [1], [0, 0, 1, 1], [], []>} : vector<8x64xf32>, vector<64x32xf32>, vector<8x32xf32> -> vector<8x32xf32>
    %c9_128 = arith.constant 9 : index
    %c0_129 = arith.constant 0 : index
    %308 = vector.load %arg7[%c9_128, %c0_129] : memref<16x32xf32, #tpu.memory_space<vmem>>, vector<1x32xf32>
    %309 = vector.broadcast %308 : vector<1x32xf32> to vector<8x32xf32>
    %310 = arith.addf %307, %309 : vector<8x32xf32>
    %311 = arith.addf %300, %310 : vector<8x32xf32>
    %c14_130 = arith.constant 14 : index
    %c0_131 = arith.constant 0 : index
    %312 = vector.load %arg7[%c14_130, %c0_131] : memref<16x32xf32, #tpu.memory_space<vmem>>, vector<1x32xf32>
    %c15_132 = arith.constant 15 : index
    %c0_133 = arith.constant 0 : index
    %313 = vector.load %arg7[%c15_132, %c0_133] : memref<16x32xf32, #tpu.memory_space<vmem>>, vector<1x32xf32>
    %cst_134 = arith.constant dense<0.000000e+00> : vector<8xf32>
    %314 = vector.multi_reduction <add>, %311, %cst_134 [1] : vector<8x32xf32> to vector<8xf32>
    %315 = vector.shape_cast %314 : vector<8xf32> to vector<8x1xf32>
    %cst_135 = arith.constant 3.200000e+01 : f32
    %316 = vector.broadcast %cst_135 : f32 to vector<8x1xf32>
    %317 = arith.divf %315, %316 : vector<8x1xf32>
    %318 = vector.broadcast %317 : vector<8x1xf32> to vector<8x32xf32>
    %319 = arith.subf %311, %318 : vector<8x32xf32>
    %320 = arith.mulf %319, %319 : vector<8x32xf32>
    %cst_136 = arith.constant dense<0.000000e+00> : vector<8xf32>
    %321 = vector.multi_reduction <add>, %320, %cst_136 [1] : vector<8x32xf32> to vector<8xf32>
    %322 = vector.shape_cast %321 : vector<8xf32> to vector<8x1xf32>
    %cst_137 = arith.constant 3.200000e+01 : f32
    %323 = vector.broadcast %cst_137 : f32 to vector<8x1xf32>
    %324 = arith.divf %322, %323 : vector<8x1xf32>
    %325 = vector.broadcast %317 : vector<8x1xf32> to vector<8x32xf32>
    %326 = arith.subf %311, %325 : vector<8x32xf32>
    %cst_138 = arith.constant 9.99999974E-6 : f32
    %327 = vector.broadcast %cst_138 : f32 to vector<8x1xf32>
    %328 = arith.addf %324, %327 : vector<8x1xf32>
    %329 = math.rsqrt %328 : vector<8x1xf32>
    %330 = vector.broadcast %329 : vector<8x1xf32> to vector<8x32xf32>
    %331 = arith.mulf %326, %330 : vector<8x32xf32>
    %332 = vector.broadcast %312 : vector<1x32xf32> to vector<8x32xf32>
    %333 = arith.mulf %331, %332 : vector<8x32xf32>
    %334 = vector.broadcast %313 : vector<1x32xf32> to vector<8x32xf32>
    %335 = arith.addf %333, %334 : vector<8x32xf32>
    %c0_139 = arith.constant 0 : index
    %c0_140 = arith.constant 0 : index
    %336 = vector.load %arg6[%c0_139, %c0_140] : memref<32x16xf32, #tpu.memory_space<vmem>>, vector<32x16xf32>
    %cst_141 = arith.constant dense<0.000000e+00> : vector<8x16xf32>
    %337 = tpu.matmul %335, %336, %cst_141 {dimension_numbers = #tpu.dot_dimension_numbers<[1], [0], [0], [1], [0, 0, 1, 1], [], []>} : vector<8x32xf32>, vector<32x16xf32>, vector<8x16xf32> -> vector<8x16xf32>
    %c0_142 = arith.constant 0 : index
    %c0_143 = arith.constant 0 : index
    %338 = vector.load %arg9[%c0_142, %c0_143] : memref<1x16xf32, #tpu.memory_space<vmem>>, vector<1x16xf32>
    %339 = vector.broadcast %338 : vector<1x16xf32> to vector<8x16xf32>
    %340 = arith.addf %337, %339 : vector<8x16xf32>
    %c0_144 = arith.constant 0 : index
    %c0_145 = arith.constant 0 : index
    %341 = vector.load %arg10[%c0_144, %c0_145] : memref<8x16xf32, #tpu.memory_space<vmem>>, vector<8x16xf32>
    tpu.vector_store %arg10[%c0_144, %c0_145], %340 {strides = array<i32>} : memref<8x16xf32, #tpu.memory_space<vmem>>, vector<8x16xf32>,
    return
  }
  func.func @transform_0(%arg0: i32) -> (i32, i32) {
    %c0_i32 = arith.constant 0 : i32
    %c0_i32_0 = arith.constant 0 : i32
    %c0_i32_1 = arith.constant 0 : i32
    return %c0_i32, %c0_i32_0 : i32, i32
  }
  func.func @transform_1(%arg0: i32) -> (i32, i32) {
    %c0_i32 = arith.constant 0 : i32
    %c0_i32_0 = arith.constant 0 : i32
    %c0_i32_1 = arith.constant 0 : i32
    return %c0_i32, %c0_i32_0 : i32, i32
  }
  func.func @transform_2(%arg0: i32) -> (i32, i32) {
    %c0_i32 = arith.constant 0 : i32
    %c0_i32_0 = arith.constant 0 : i32
    %c0_i32_1 = arith.constant 0 : i32
    return %c0_i32, %c0_i32_0 : i32, i32
  }
  func.func @transform_3(%arg0: i32) -> (i32, i32) {
    %c0_i32 = arith.constant 0 : i32
    %c0_i32_0 = arith.constant 0 : i32
    %c0_i32_1 = arith.constant 0 : i32
    return %c0_i32, %c0_i32_0 : i32, i32
  }
  func.func @transform_4(%arg0: i32) -> (i32, i32) {
    %c0_i32 = arith.constant 0 : i32
    %c0_i32_0 = arith.constant 0 : i32
    %c0_i32_1 = arith.constant 0 : i32
    return %c0_i32, %c0_i32_0 : i32, i32
  }
  func.func @transform_5(%arg0: i32) -> (i32, i32) {
    %c0_i32 = arith.constant 0 : i32
    %c0_i32_0 = arith.constant 0 : i32
    %c0_i32_1 = arith.constant 0 : i32
    return %c0_i32, %c0_i32_0 : i32, i32
  }
  func.func @transform_6(%arg0: i32) -> (i32, i32) {
    %c0_i32 = arith.constant 0 : i32
    %c0_i32_0 = arith.constant 0 : i32
    %c0_i32_1 = arith.constant 0 : i32
    return %c0_i32, %c0_i32_0 : i32, i32
  }
  func.func @transform_7(%arg0: i32) -> (i32, i32) {
    %c0_i32 = arith.constant 0 : i32
    %c0_i32_0 = arith.constant 0 : i32
    %c0_i32_1 = arith.constant 0 : i32
    return %c0_i32, %c0_i32_0 : i32, i32
  }
  func.func @transform_8(%arg0: i32) -> (i32, i32) {
    %c0_i32 = arith.constant 0 : i32
    %c0_i32_0 = arith.constant 0 : i32
    %c0_i32_1 = arith.constant 0 : i32
    return %c0_i32, %c0_i32_0 : i32, i32
  }
  func.func @transform_9(%arg0: i32) -> (i32, i32) {
    %c0_i32 = arith.constant 0 : i32
    %c0_i32_0 = arith.constant 0 : i32
    %c0_i32_1 = arith.constant 0 : i32
    return %c0_i32, %c0_i32_0 : i32, i32
  }
}

</mosaic_0001>

<llo_original>
// kernel: model_forward.1
$region0: #{model_forward.1}
  #allocation0 [shape = 'u32[]', space=smem, size = 0x4, offset = 0x4, fixed_abs, tag = 'smem constant byte address 0x4 - core index']
  #allocation1 [shape = 'u32[144,128]{1,0:T(1,128)}', space=vmem, size = 0x12000, scoped, tag = 'internal scratch']
  %s0 = inlined_call_operand.vmem [shape: f32[8,16], index: 0, kind: input, shape index: {}]
  %s1 = inlined_call_operand.vmem [shape: s32[8,1], index: 1, kind: input, shape index: {}]
  %s2 = inlined_call_operand.vmem [shape: f32[100,32], index: 2, kind: input, shape index: {}]
  %s3 = inlined_call_operand.vmem [shape: f32[240,32], index: 3, kind: input, shape index: {}]
  %s4 = inlined_call_operand.vmem [shape: f32[64,64], index: 4, kind: input, shape index: {}]
  %s5 = inlined_call_operand.vmem [shape: f32[32,16], index: 5, kind: input, shape index: {}]
  %s6 = inlined_call_operand.vmem [shape: f32[16,32], index: 6, kind: input, shape index: {}]
  %s7 = inlined_call_operand.vmem [shape: f32[2,64], index: 7, kind: input, shape index: {}]
  %s8 = inlined_call_operand.vmem [shape: f32[1,16], index: 8, kind: input, shape index: {}]
  %s9 = inlined_call_operand.hbm [shape: f32[8,16], index: 9, kind: output, shape index: {}]
  %s10 = sld [smem:[#allocation0]]
  $region46: #{model_forward.1} parent=0
    _
  %s12 = ssub.s32 1, %s10
  %s13 = scalar_select 0, %s12, %s10
  $region1: #{model_forward.1} parent=0
    #allocation2 [shape = 'u8[4096]{0}', space=vmem, size = 0x1000, scoped, tag = 'output window, operand 0, single buffered']
    #allocation3 [shape = 's32[1]{0}', space=sflag, size = 0x4, scoped, tag = 'scoped memory for model_forward.1']
    %14 = vsyncpa [#allocation3], 0
    // Predicated region
    $region2: #{model_forward.1} parent=1 // pred_check
      _
    $region3: #{model_forward.1} parent=1 // pred_check_branch
      %16 = sbr.rel (0) target = $region5
    $region4: #{model_forward.1} parent=1 // pred_region
      _
    $region5: #{model_forward.1} parent=1 // pred_fallthru
      _
    // Predicated region
    $region6: #{model_forward.1} parent=1 // pred_check
      _
    $region7: #{model_forward.1} parent=1 // pred_check_branch
      %18 = sbr.rel (0) target = $region9
    $region8: #{model_forward.1} parent=1 // pred_region
      _
    $region9: #{model_forward.1} parent=1 // pred_fallthru
      _
    // Predicated region
    $region10: #{model_forward.1} parent=1 // pred_check
      _
    $region11: #{model_forward.1} parent=1 // pred_check_branch
      %20 = sbr.rel (0) target = $region13
    $region12: #{model_forward.1} parent=1 // pred_region
      _
    $region13: #{model_forward.1} parent=1 // pred_fallthru
      _
    // Predicated region
    $region14: #{model_forward.1} parent=1 // pred_check
      _
    $region15: #{model_forward.1} parent=1 // pred_check_branch
      %22 = sbr.rel (0) target = $region17
    $region16: #{model_forward.1} parent=1 // pred_region
      _
    $region17: #{model_forward.1} parent=1 // pred_fallthru
      _
    // Predicated region
    $region18: #{model_forward.1} parent=1 // pred_check
      _
    $region19: #{model_forward.1} parent=1 // pred_check_branch
      %24 = sbr.rel (0) target = $region21
    $region20: #{model_forward.1} parent=1 // pred_region
      _
    $region21: #{model_forward.1} parent=1 // pred_fallthru
      _
    // Predicated region
    $region22: #{model_forward.1} parent=1 // pred_check
      _
    $region23: #{model_forward.1} parent=1 // pred_check_branch
      %26 = sbr.rel (0) target = $region25
    $region24: #{model_forward.1} parent=1 // pred_region
      _
    $region25: #{model_forward.1} parent=1 // pred_fallthru
      _
    // Predicated region
    $region26: #{model_forward.1} parent=1 // pred_check
      _
    $region27: #{model_forward.1} parent=1 // pred_check_branch
      %28 = sbr.rel (0) target = $region29
    $region28: #{model_forward.1} parent=1 // pred_region
      _
    $region29: #{model_forward.1} parent=1 // pred_fallthru
      _
    // Predicated region
    $region30: #{model_forward.1} parent=1 // pred_check
      _
    $region31: #{model_forward.1} parent=1 // pred_check_branch
      %30 = sbr.rel (0) target = $region33
    $region32: #{model_forward.1} parent=1 // pred_region
      _
    $region33: #{model_forward.1} parent=1 // pred_fallthru
      _
    // Predicated region
    $region34: #{model_forward.1} parent=1 // pred_check
      _
    $region35: #{model_forward.1} parent=1 // pred_check_branch
      %32 = sbr.rel (0) target = $region37
    $region36: #{model_forward.1} parent=1 // pred_region
      _
    $region37: #{model_forward.1} parent=1 // pred_fallthru
      _
    %v33 = vlaneseq
    %v34 = vand.u32 %v33, 127
    %v35 = vld [vmem:[%s1] sm:$0xff]
    %36 = vset.pattern.permute.xlu0 0
    %37 = vperm.xlu0 %36, %v35
    %v38 = vpop.permute.xlu0 %37
    %vm39 = vcmp.eq.s32.totalorder %v34, %v38
    %v40 = vsel %vm39, 1, 0
    %v41 = vcvt.s32.f32 %v40
    %v42 = vld [vmem:[%s0] sm:$0xff]
    %v43 = vld [vmem:[%s3] sm:$0xff]
    %v44 = vld [vmem:[%s3 + $0x8] sm:$0xff]
    %v45 = vld [vmem:[%s6] sm:$0x1]
    %v46 = vlaneseq
    %v47 = vshrl.u32 %v46, 7
    %v48 = vsub.s32 0, %v47
    %v49 = vrot.slane %v45, %v48
    %vm50 = vcmask 130048
    %v52 = vsel %vm50, %v42, 0
    %54 = vmatprep.subr.mxu0 0.0
    %55 = vmatpush1.msra.mxu0 0.0
    %56 = vmatprep.subr.mxu0 0.0
    %57 = vmatpush1.msra.mxu0 0.0
    %58 = vmatprep.subr.mxu0 0.0
    %59 = vmatpush1.msra.mxu0 0.0
    %60 = vmatprep.subr.mxu0 0.0
    %61 = vmatpush1.msra.mxu0 0.0
    %62 = vmatprep.subr.mxu0 0.0
    %63 = vmatpush1.msra.mxu0 0.0
    %64 = vmatprep.subr.mxu0 0.0
    %65 = vmatpush1.msra.mxu0 0.0
    %66 = vmatprep.subr.mxu0 0.0
    %67 = vmatpush1.msra.mxu0 0.0
    %68 = vmatprep.subr.mxu0 0.0
    %69 = vmatpush1.msra.mxu0 0.0
    %70 = vmatprep.subr.mxu0 0.0
    %71 = vmatpush1.msra.mxu0 0.0
    %72 = vmatprep.subr.mxu0 0.0
    %73 = vmatpush1.msra.mxu0 0.0
    %74 = vmatprep.subr.mxu0 0.0
    %75 = vmatpush1.msra.mxu0 0.0
    %76 = vmatprep.subr.mxu0 0.0
    %77 = vmatpush1.msra.mxu0 0.0
    %78 = vmatprep.subr.mxu0 0.0
    %79 = vmatpush1.msra.mxu0 0.0
    %80 = vmatprep.subr.mxu0 0.0
    %81 = vmatpush1.msra.mxu0 0.0
    %82 = vmatprep.subr.mxu0 0.0
    %83 = vmatpush1.msra.mxu0 %v44
    %84 = vmatprep.subr.mxu0 0.0
    %85 = vmatpush1.msra.mxu0 %v43
    %86 = vmatprep.subr.mxu0 0.0
    %87 = vmatpush2.msra.mxu0 0.0
    %88 = vmatprep.subr.mxu0 0.0
    %89 = vmatpush2.msra.mxu0 0.0
    %90 = vmatprep.subr.mxu0 0.0
    %91 = vmatpush2.msra.mxu0 0.0
    %92 = vmatprep.subr.mxu0 0.0
    %93 = vmatpush2.msra.mxu0 0.0
    %94 = vmatprep.subr.mxu0 0.0
    %95 = vmatpush2.msra.mxu0 0.0
    %96 = vmatprep.subr.mxu0 0.0
    %97 = vmatpush2.msra.mxu0 0.0
    %98 = vmatprep.subr.mxu0 0.0
    %99 = vmatpush2.msra.mxu0 0.0
    %100 = vmatprep.subr.mxu0 0.0
    %101 = vmatpush2.msra.mxu0 0.0
    %102 = vmatprep.subr.mxu0 0.0
    %103 = vmatpush2.msra.mxu0 0.0
    %104 = vmatprep.subr.mxu0 0.0
    %105 = vmatpush2.msra.mxu0 0.0
    %106 = vmatprep.subr.mxu0 0.0
    %107 = vmatpush2.msra.mxu0 0.0
    %108 = vmatprep.subr.mxu0 0.0
    %109 = vmatpush2.msra.mxu0 0.0
    %110 = vmatprep.subr.mxu0 0.0
    %111 = vmatpush2.msra.mxu0 0.0
    %112 = vmatprep.subr.mxu0 0.0
    %113 = vmatpush2.msra.mxu0 0.0
    %114 = vmatprep.subr.mxu0 0.0
    %115 = vmatpush2.msra.mxu0 0.0
    %116 = vmatprep.subr.mxu0 0.0
    %117 = vmatpush2.msra.mxu0 0.0
    %118 = vmatprep.mubr.f32.mxu0 0.0
    %119 = vmatmul.mubr.f32.gmra.mxu0 %v52
    %v120 = vpop.f32.mrf.mxu0
    %v121 = vadd.f32 %v49, %v120
    %v122 = vpop.f32.mrf.mxu0
    %123 = vdwg.mxu0
    %v124 = vld [vmem:[%s2] sm:$0xff]
    %v125 = vld [vmem:[%s2 + $0x8] sm:$0xff]
    %v126 = vld [vmem:[%s2 + $0x10] sm:$0xff]
    %v127 = vld [vmem:[%s2 + $0x18] sm:$0xff]
    %v128 = vld [vmem:[%s2 + $0x20] sm:$0xff]
    %v129 = vld [vmem:[%s2 + $0x28] sm:$0xff]
    %v130 = vld [vmem:[%s2 + $0x30] sm:$0xff]
    %v131 = vld [vmem:[%s2 + $0x38] sm:$0xff]
    %v132 = vld [vmem:[%s2 + $0x40] sm:$0xff]
    %v133 = vld [vmem:[%s2 + $0x48] sm:$0xff]
    %v134 = vld [vmem:[%s2 + $0x50] sm:$0xff]
    %v135 = vld [vmem:[%s2 + $0x58] sm:$0xff]
    %v136 = vld [vmem:[%s2 + $0x60] sm:$0xf]
    %vm137 = vcmask 818176
    %v139 = vsel %vm137, %v41, 0
    %vm141 = vcmask 1043456
    %v143 = vsel %vm141, %v136, 0
    %145 = vmatprep.subr.mxu0 0.0
    %146 = vmatpush1.msra.mxu0 0.0
    %147 = vmatprep.subr.mxu0 0.0
    %148 = vmatpush1.msra.mxu0 0.0
    %149 = vmatprep.subr.mxu0 0.0
    %150 = vmatpush1.msra.mxu0 0.0
    %151 = vmatprep.subr.mxu0 0.0
    %152 = vmatpush1.msra.mxu0 %v143
    %153 = vmatprep.subr.mxu0 0.0
    %154 = vmatpush1.msra.mxu0 %v135
    %155 = vmatprep.subr.mxu0 0.0
    %156 = vmatpush1.msra.mxu0 %v134
    %157 = vmatprep.subr.mxu0 0.0
    %158 = vmatpush1.msra.mxu0 %v133
    %159 = vmatprep.subr.mxu0 0.0
    %160 = vmatpush1.msra.mxu0 %v132
    %161 = vmatprep.subr.mxu0 0.0
    %162 = vmatpush1.msra.mxu0 %v131
    %163 = vmatprep.subr.mxu0 0.0
    %164 = vmatpush1.msra.mxu0 %v130
    %165 = vmatprep.subr.mxu0 0.0
    %166 = vmatpush1.msra.mxu0 %v129
    %167 = vmatprep.subr.mxu0 0.0
    %168 = vmatpush1.msra.mxu0 %v128
    %169 = vmatprep.subr.mxu0 0.0
    %170 = vmatpush1.msra.mxu0 %v127
    %171 = vmatprep.subr.mxu0 0.0
    %172 = vmatpush1.msra.mxu0 %v126
    %173 = vmatprep.subr.mxu0 0.0
    %174 = vmatpush1.msra.mxu0 %v125
    %175 = vmatprep.subr.mxu0 0.0
    %176 = vmatpush1.msra.mxu0 %v124
    %177 = vmatprep.subr.mxu0 0.0
    %178 = vmatpush2.msra.mxu0 0.0
    %179 = vmatprep.subr.mxu0 0.0
    %180 = vmatpush2.msra.mxu0 0.0
    %181 = vmatprep.subr.mxu0 0.0
    %182 = vmatpush2.msra.mxu0 0.0
    %183 = vmatprep.subr.mxu0 0.0
    %184 = vmatpush2.msra.mxu0 0.0
    %185 = vmatprep.subr.mxu0 0.0
    %186 = vmatpush2.msra.mxu0 0.0
    %187 = vmatprep.subr.mxu0 0.0
    %188 = vmatpush2.msra.mxu0 0.0
    %189 = vmatprep.subr.mxu0 0.0
    %190 = vmatpush2.msra.mxu0 0.0
    %191 = vmatprep.subr.mxu0 0.0
    %192 = vmatpush2.msra.mxu0 0.0
    %193 = vmatprep.subr.mxu0 0.0
    %194 = vmatpush2.msra.mxu0 0.0
    %195 = vmatprep.subr.mxu0 0.0
    %196 = vmatpush2.msra.mxu0 0.0
    %197 = vmatprep.subr.mxu0 0.0
    %198 = vmatpush2.msra.mxu0 0.0
    %199 = vmatprep.subr.mxu0 0.0
    %200 = vmatpush2.msra.mxu0 0.0
    %201 = vmatprep.subr.mxu0 0.0
    %202 = vmatpush2.msra.mxu0 0.0
    %203 = vmatprep.subr.mxu0 0.0
    %204 = vmatpush2.msra.mxu0 0.0
    %205 = vmatprep.subr.mxu0 0.0
    %206 = vmatpush2.msra.mxu0 0.0
    %207 = vmatprep.subr.mxu0 0.0
    %208 = vmatpush2.msra.mxu0 0.0
    %209 = vmatprep.mubr.f32.mxu0 0.0
    %210 = vmatmul.mubr.f32.gmra.mxu0 %v139
    %v211 = vpop.f32.mrf.mxu0
    %v212 = vadd.f32 0.0, %v211
    %v213 = vpop.f32.mrf.mxu0
    %214 = vdwg.mxu0
    %v215 = vadd.f32 %v121, %v212
    %v216 = vld [vmem:[%s3 + $0x10] sm:$0xff]
    %v217 = vld [vmem:[%s3 + $0x18] sm:$0xff]
    %v218 = vld [vmem:[%s3 + $0x20] sm:$0xff]
    %v219 = vld [vmem:[%s3 + $0x28] sm:$0xff]
    %v220 = vld [vmem:[%s4] sm:$0xff]
    %v221 = vld [vmem:[%s4 + $0x8] sm:$0xff]
    %v222 = vld [vmem:[%s4 + $0x10] sm:$0xff]
    %v223 = vld [vmem:[%s4 + $0x18] sm:$0xff]
    %v224 = vld [vmem:[%s3 + $0x30] sm:$0xff]
    %v225 = vld [vmem:[%s3 + $0x38] sm:$0xff]
    %v226 = vld [vmem:[%s3 + $0x40] sm:$0xff]
    %v227 = vld [vmem:[%s3 + $0x48] sm:$0xff]
    %v228 = vld [vmem:[%s3 + $0x50] sm:$0xff]
    %v229 = vld [vmem:[%s3 + $0x58] sm:$0xff]
    %v230 = vld [vmem:[%s3 + $0x60] sm:$0xff]
    %v231 = vld [vmem:[%s3 + $0x68] sm:$0xff]
    %v232 = vld [vmem:[%s6 + $0x1] sm:$0x1]
    %v233 = vlaneseq
    %v234 = vshrl.u32 %v233, 7
    %v235 = vsub.s32 0, %v234
    %v236 = vrot.slane %v232, %v235
    %vm237 = vcmask 261120
    %v239 = vsel %vm237, %v215, 0
    %241 = vmatprep.subr.mxu0 0.0
    %242 = vmatpush1.msra.mxu0 0.0
    %243 = vmatprep.subr.mxu0 0.0
    %244 = vmatpush1.msra.mxu0 0.0
    %245 = vmatprep.subr.mxu0 0.0
    %246 = vmatpush1.msra.mxu0 0.0
    %247 = vmatprep.subr.mxu0 0.0
    %248 = vmatpush1.msra.mxu0 0.0
    %249 = vmatprep.subr.mxu0 0.0
    %250 = vmatpush1.msra.mxu0 0.0
    %251 = vmatprep.subr.mxu0 0.0
    %252 = vmatpush1.msra.mxu0 0.0
    %253 = vmatprep.subr.mxu0 0.0
    %254 = vmatpush1.msra.mxu0 0.0
    %255 = vmatprep.subr.mxu0 0.0
    %256 = vmatpush1.msra.mxu0 0.0
    %257 = vmatprep.subr.mxu0 0.0
    %258 = vmatpush1.msra.mxu0 0.0
    %259 = vmatprep.subr.mxu0 0.0
    %260 = vmatpush1.msra.mxu0 0.0
    %261 = vmatprep.subr.mxu0 0.0
    %262 = vmatpush1.msra.mxu0 0.0
    %263 = vmatprep.subr.mxu0 0.0
    %264 = vmatpush1.msra.mxu0 0.0
    %265 = vmatprep.subr.mxu0 0.0
    %266 = vmatpush1.msra.mxu0 %v219
    %267 = vmatprep.subr.mxu0 0.0
    %268 = vmatpush1.msra.mxu0 %v218
    %269 = vmatprep.subr.mxu0 0.0
    %270 = vmatpush1.msra.mxu0 %v217
    %271 = vmatprep.subr.mxu0 0.0
    %272 = vmatpush1.msra.mxu0 %v216
    %273 = vmatprep.subr.mxu0 0.0
    %274 = vmatpush2.msra.mxu0 0.0
    %275 = vmatprep.subr.mxu0 0.0
    %276 = vmatpush2.msra.mxu0 0.0
    %277 = vmatprep.subr.mxu0 0.0
    %278 = vmatpush2.msra.mxu0 0.0
    %279 = vmatprep.subr.mxu0 0.0
    %280 = vmatpush2.msra.mxu0 0.0
    %281 = vmatprep.subr.mxu0 0.0
    %282 = vmatpush2.msra.mxu0 0.0
    %283 = vmatprep.subr.mxu0 0.0
    %284 = vmatpush2.msra.mxu0 0.0
    %285 = vmatprep.subr.mxu0 0.0
    %286 = vmatpush2.msra.mxu0 0.0
    %287 = vmatprep.subr.mxu0 0.0
    %288 = vmatpush2.msra.mxu0 0.0
    %289 = vmatprep.subr.mxu0 0.0
    %290 = vmatpush2.msra.mxu0 0.0
    %291 = vmatprep.subr.mxu0 0.0
    %292 = vmatpush2.msra.mxu0 0.0
    %293 = vmatprep.subr.mxu0 0.0
    %294 = vmatpush2.msra.mxu0 0.0
    %295 = vmatprep.subr.mxu0 0.0
    %296 = vmatpush2.msra.mxu0 0.0
    %297 = vmatprep.subr.mxu0 0.0
    %298 = vmatpush2.msra.mxu0 0.0
    %299 = vmatprep.subr.mxu0 0.0
    %300 = vmatpush2.msra.mxu0 0.0
    %301 = vmatprep.subr.mxu0 0.0
    %302 = vmatpush2.msra.mxu0 0.0
    %303 = vmatprep.subr.mxu0 0.0
    %304 = vmatpush2.msra.mxu0 0.0
    %305 = vmatprep.mubr.f32.mxu0 0.0
    %306 = vmatmul.mubr.f32.gmra.mxu0 %v239
    %v307 = vpop.f32.mrf.mxu0
    %v308 = vadd.f32 %v236, %v307
    %v309 = vpop.f32.mrf.mxu0
    %310 = vdwg.mxu0
    %v311 = vadd.f32 %v215, %v308
    %v312 = vld [vmem:[%s6 + $0x3] sm:$0x1]
    %v313 = vld [vmem:[%s6 + $0x4] sm:$0x1]
    %v314 = vsel %vm237, %v311, 0.0
    %315 = vadd.xlane.f32.xlu0 %v314
    %v316 = vpop.xlane.xlu0 %315
    %v317 = vrcp.pop 32.0
    %v318 = vmul.f32 %v316, %v317
    %v319 = vsub.f32 %v311, %v318
    %v320 = vmul.f32 %v319, %v319
    %v321 = vsel %vm237, %v320, 0.0
    %322 = vadd.xlane.f32.xlu0 %v321
    %v323 = vpop.xlane.xlu0 %322
    %v324 = vmul.f32 %v323, %v317
    %v325 = vadd.f32 %v324, 1e-05
    %v326 = vrsqrt.pop %v325
    %v327 = vmul.f32 %v319, %v326
    %v328 = vlaneseq
    %v329 = vshrl.u32 %v328, 7
    %v330 = vsub.s32 0, %v329
    %v331 = vrot.slane %v312, %v330
    %v332 = vmul.f32 %v327, %v331
    %v333 = vlaneseq
    %v334 = vshrl.u32 %v333, 7
    %v335 = vsub.s32 0, %v334
    %v336 = vrot.slane %v313, %v335
    %v337 = vadd.f32 %v332, %v336
    %v338 = vld [vmem:[%s7] sm:$0x1]
    %v339 = vlaneseq
    %v340 = vshrl.u32 %v339, 7
    %v341 = vsub.s32 0, %v340
    %v342 = vrot.slane %v338, %v341
    %v344 = vsel %vm237, %v337, 0
    %346 = vmatprep.subr.mxu0 0.0
    %347 = vmatpush1.msra.mxu0 0.0
    %348 = vmatprep.subr.mxu0 0.0
    %349 = vmatpush1.msra.mxu0 0.0
    %350 = vmatprep.subr.mxu0 0.0
    %351 = vmatpush1.msra.mxu0 0.0
    %352 = vmatprep.subr.mxu0 0.0
    %353 = vmatpush1.msra.mxu0 0.0
    %354 = vmatprep.subr.mxu0 0.0
    %355 = vmatpush1.msra.mxu0 0.0
    %356 = vmatprep.subr.mxu0 0.0
    %357 = vmatpush1.msra.mxu0 0.0
    %358 = vmatprep.subr.mxu0 0.0
    %359 = vmatpush1.msra.mxu0 0.0
    %360 = vmatprep.subr.mxu0 0.0
    %361 = vmatpush1.msra.mxu0 0.0
    %362 = vmatprep.subr.mxu0 0.0
    %363 = vmatpush1.msra.mxu0 0.0
    %364 = vmatprep.subr.mxu0 0.0
    %365 = vmatpush1.msra.mxu0 0.0
    %366 = vmatprep.subr.mxu0 0.0
    %367 = vmatpush1.msra.mxu0 0.0
    %368 = vmatprep.subr.mxu0 0.0
    %369 = vmatpush1.msra.mxu0 0.0
    %370 = vmatprep.subr.mxu0 0.0
    %371 = vmatpush1.msra.mxu0 %v223
    %372 = vmatprep.subr.mxu0 0.0
    %373 = vmatpush1.msra.mxu0 %v222
    %374 = vmatprep.subr.mxu0 0.0
    %375 = vmatpush1.msra.mxu0 %v221
    %376 = vmatprep.subr.mxu0 0.0
    %377 = vmatpush1.msra.mxu0 %v220
    %378 = vmatprep.subr.mxu0 0.0
    %379 = vmatpush2.msra.mxu0 0.0
    %380 = vmatprep.subr.mxu0 0.0
    %381 = vmatpush2.msra.mxu0 0.0
    %382 = vmatprep.subr.mxu0 0.0
    %383 = vmatpush2.msra.mxu0 0.0
    %384 = vmatprep.subr.mxu0 0.0
    %385 = vmatpush2.msra.mxu0 0.0
    %386 = vmatprep.subr.mxu0 0.0
    %387 = vmatpush2.msra.mxu0 0.0
    %388 = vmatprep.subr.mxu0 0.0
    %389 = vmatpush2.msra.mxu0 0.0
    %390 = vmatprep.subr.mxu0 0.0
    %391 = vmatpush2.msra.mxu0 0.0
    %392 = vmatprep.subr.mxu0 0.0
    %393 = vmatpush2.msra.mxu0 0.0
    %394 = vmatprep.subr.mxu0 0.0
    %395 = vmatpush2.msra.mxu0 0.0
    %396 = vmatprep.subr.mxu0 0.0
    %397 = vmatpush2.msra.mxu0 0.0
    %398 = vmatprep.subr.mxu0 0.0
    %399 = vmatpush2.msra.mxu0 0.0
    %400 = vmatprep.subr.mxu0 0.0
    %401 = vmatpush2.msra.mxu0 0.0
    %402 = vmatprep.subr.mxu0 0.0
    %403 = vmatpush2.msra.mxu0 0.0
    %404 = vmatprep.subr.mxu0 0.0
    %405 = vmatpush2.msra.mxu0 0.0
    %406 = vmatprep.subr.mxu0 0.0
    %407 = vmatpush2.msra.mxu0 0.0
    %408 = vmatprep.subr.mxu0 0.0
    %409 = vmatpush2.msra.mxu0 0.0
    %410 = vmatprep.mubr.f32.mxu0 0.0
    %411 = vmatmul.mubr.f32.gmra.mxu0 %v344
    %v412 = vpop.f32.mrf.mxu0
    %v413 = vadd.f32 %v342, %v412
    %v414 = vpop.f32.mrf.mxu0
    %415 = vdwg.mxu0
    %v416 = vmax.f32 %v413, 0.0
    %v417 = vld [vmem:[%s6 + $0x2] sm:$0x1]
    %v418 = vlaneseq
    %v419 = vshrl.u32 %v418, 7
    %v420 = vsub.s32 0, %v419
    %v421 = vrot.slane %v417, %v420
    %vm422 = vcmask 523264
    %v424 = vsel %vm422, %v416, 0
    %426 = vmatprep.subr.mxu0 0.0
    %427 = vmatpush1.msra.mxu0 0.0
    %428 = vmatprep.subr.mxu0 0.0
    %429 = vmatpush1.msra.mxu0 0.0
    %430 = vmatprep.subr.mxu0 0.0
    %431 = vmatpush1.msra.mxu0 0.0
    %432 = vmatprep.subr.mxu0 0.0
    %433 = vmatpush1.msra.mxu0 0.0
    %434 = vmatprep.subr.mxu0 0.0
    %435 = vmatpush1.msra.mxu0 0.0
    %436 = vmatprep.subr.mxu0 0.0
    %437 = vmatpush1.msra.mxu0 0.0
    %438 = vmatprep.subr.mxu0 0.0
    %439 = vmatpush1.msra.mxu0 0.0
    %440 = vmatprep.subr.mxu0 0.0
    %441 = vmatpush1.msra.mxu0 0.0
    %442 = vmatprep.subr.mxu0 0.0
    %443 = vmatpush1.msra.mxu0 %v231
    %444 = vmatprep.subr.mxu0 0.0
    %445 = vmatpush1.msra.mxu0 %v230
    %446 = vmatprep.subr.mxu0 0.0
    %447 = vmatpush1.msra.mxu0 %v229
    %448 = vmatprep.subr.mxu0 0.0
    %449 = vmatpush1.msra.mxu0 %v228
    %450 = vmatprep.subr.mxu0 0.0
    %451 = vmatpush1.msra.mxu0 %v227
    %452 = vmatprep.subr.mxu0 0.0
    %453 = vmatpush1.msra.mxu0 %v226
    %454 = vmatprep.subr.mxu0 0.0
    %455 = vmatpush1.msra.mxu0 %v225
    %456 = vmatprep.subr.mxu0 0.0
    %457 = vmatpush1.msra.mxu0 %v224
    %458 = vmatprep.subr.mxu0 0.0
    %459 = vmatpush2.msra.mxu0 0.0
    %460 = vmatprep.subr.mxu0 0.0
    %461 = vmatpush2.msra.mxu0 0.0
    %462 = vmatprep.subr.mxu0 0.0
    %463 = vmatpush2.msra.mxu0 0.0
    %464 = vmatprep.subr.mxu0 0.0
    %465 = vmatpush2.msra.mxu0 0.0
    %466 = vmatprep.subr.mxu0 0.0
    %467 = vmatpush2.msra.mxu0 0.0
    %468 = vmatprep.subr.mxu0 0.0
    %469 = vmatpush2.msra.mxu0 0.0
    %470 = vmatprep.subr.mxu0 0.0
    %471 = vmatpush2.msra.mxu0 0.0
    %472 = vmatprep.subr.mxu0 0.0
    %473 = vmatpush2.msra.mxu0 0.0
    %474 = vmatprep.subr.mxu0 0.0
    %475 = vmatpush2.msra.mxu0 0.0
    %476 = vmatprep.subr.mxu0 0.0
    %477 = vmatpush2.msra.mxu0 0.0
    %478 = vmatprep.subr.mxu0 0.0
    %479 = vmatpush2.msra.mxu0 0.0
    %480 = vmatprep.subr.mxu0 0.0
    %481 = vmatpush2.msra.mxu0 0.0
    %482 = vmatprep.subr.mxu0 0.0
    %483 = vmatpush2.msra.mxu0 0.0
    %484 = vmatprep.subr.mxu0 0.0
    %485 = vmatpush2.msra.mxu0 0.0
    %486 = vmatprep.subr.mxu0 0.0
    %487 = vmatpush2.msra.mxu0 0.0
    %488 = vmatprep.subr.mxu0 0.0
    %489 = vmatpush2.msra.mxu0 0.0
    %490 = vmatprep.mubr.f32.mxu0 0.0
    %491 = vmatmul.mubr.f32.gmra.mxu0 %v424
    %v492 = vpop.f32.mrf.mxu0
    %v493 = vadd.f32 %v421, %v492
    %v494 = vpop.f32.mrf.mxu0
    %495 = vdwg.mxu0
    %v496 = vadd.f32 %v337, %v493
    %v497 = vld [vmem:[%s6 + $0x5] sm:$0x1]
    %v498 = vld [vmem:[%s6 + $0x6] sm:$0x1]
    %v499 = vsel %vm237, %v496, 0.0
    %500 = vadd.xlane.f32.xlu0 %v499
    %v501 = vpop.xlane.xlu0 %500
    %v502 = vmul.f32 %v501, %v317
    %v503 = vsub.f32 %v496, %v502
    %v504 = vmul.f32 %v503, %v503
    %v505 = vsel %vm237, %v504, 0.0
    %506 = vadd.xlane.f32.xlu0 %v505
    %v507 = vpop.xlane.xlu0 %506
    %v508 = vmul.f32 %v507, %v317
    %v509 = vadd.f32 %v508, 1e-05
    %v510 = vrsqrt.pop %v509
    %v511 = vmul.f32 %v503, %v510
    %v512 = vlaneseq
    %v513 = vshrl.u32 %v512, 7
    %v514 = vsub.s32 0, %v513
    %v515 = vrot.slane %v497, %v514
    %v516 = vmul.f32 %v511, %v515
    %v517 = vlaneseq
    %v518 = vshrl.u32 %v517, 7
    %v519 = vsub.s32 0, %v518
    %v520 = vrot.slane %v498, %v519
    %v521 = vadd.f32 %v516, %v520
    %v523 = vsel %vm237, %v521, 0
    %525 = vmatprep.subr.mxu0 0.0
    %526 = vmatpush1.msra.mxu0 0.0
    %527 = vmatprep.subr.mxu0 0.0
    %528 = vmatpush1.msra.mxu0 0.0
    %529 = vmatprep.subr.mxu0 0.0
    %530 = vmatpush1.msra.mxu0 0.0
    %531 = vmatprep.subr.mxu0 0.0
    %532 = vmatpush1.msra.mxu0 0.0
    %533 = vmatprep.subr.mxu0 0.0
    %534 = vmatpush1.msra.mxu0 0.0
    %535 = vmatprep.subr.mxu0 0.0
    %536 = vmatpush1.msra.mxu0 0.0
    %537 = vmatprep.subr.mxu0 0.0
    %538 = vmatpush1.msra.mxu0 0.0
    %539 = vmatprep.subr.mxu0 0.0
    %540 = vmatpush1.msra.mxu0 0.0
    %541 = vmatprep.subr.mxu0 0.0
    %542 = vmatpush1.msra.mxu0 0.0
    %543 = vmatprep.subr.mxu0 0.0
    %544 = vmatpush1.msra.mxu0 0.0
    %545 = vmatprep.subr.mxu0 0.0
    %546 = vmatpush1.msra.mxu0 0.0
    %547 = vmatprep.subr.mxu0 0.0
    %548 = vmatpush1.msra.mxu0 0.0
    %549 = vmatprep.subr.mxu0 0.0
    %550 = vmatpush1.msra.mxu0 %v219
    %551 = vmatprep.subr.mxu0 0.0
    %552 = vmatpush1.msra.mxu0 %v218
    %553 = vmatprep.subr.mxu0 0.0
    %554 = vmatpush1.msra.mxu0 %v217
    %555 = vmatprep.subr.mxu0 0.0
    %556 = vmatpush1.msra.mxu0 %v216
    %557 = vmatprep.subr.mxu0 0.0
    %558 = vmatpush2.msra.mxu0 0.0
    %559 = vmatprep.subr.mxu0 0.0
    %560 = vmatpush2.msra.mxu0 0.0
    %561 = vmatprep.subr.mxu0 0.0
    %562 = vmatpush2.msra.mxu0 0.0
    %563 = vmatprep.subr.mxu0 0.0
    %564 = vmatpush2.msra.mxu0 0.0
    %565 = vmatprep.subr.mxu0 0.0
    %566 = vmatpush2.msra.mxu0 0.0
    %567 = vmatprep.subr.mxu0 0.0
    %568 = vmatpush2.msra.mxu0 0.0
    %569 = vmatprep.subr.mxu0 0.0
    %570 = vmatpush2.msra.mxu0 0.0
    %571 = vmatprep.subr.mxu0 0.0
    %572 = vmatpush2.msra.mxu0 0.0
    %573 = vmatprep.subr.mxu0 0.0
    %574 = vmatpush2.msra.mxu0 0.0
    %575 = vmatprep.subr.mxu0 0.0
    %576 = vmatpush2.msra.mxu0 0.0
    %577 = vmatprep.subr.mxu0 0.0
    %578 = vmatpush2.msra.mxu0 0.0
    %579 = vmatprep.subr.mxu0 0.0
    %580 = vmatpush2.msra.mxu0 0.0
    %581 = vmatprep.subr.mxu0 0.0
    %582 = vmatpush2.msra.mxu0 0.0
    %583 = vmatprep.subr.mxu0 0.0
    %584 = vmatpush2.msra.mxu0 0.0
    %585 = vmatprep.subr.mxu0 0.0
    %586 = vmatpush2.msra.mxu0 0.0
    %587 = vmatprep.subr.mxu0 0.0
    %588 = vmatpush2.msra.mxu0 0.0
    %589 = vmatprep.mubr.f32.mxu0 0.0
    %590 = vmatmul.mubr.f32.gmra.mxu0 %v523
    %v591 = vpop.f32.mrf.mxu0
    %v592 = vadd.f32 %v236, %v591
    %v593 = vpop.f32.mrf.mxu0
    %594 = vdwg.mxu0
    %v595 = vadd.f32 %v521, %v592
    %v596 = vsel %vm237, %v595, 0.0
    %597 = vadd.xlane.f32.xlu0 %v596
    %v598 = vpop.xlane.xlu0 %597
    %v599 = vmul.f32 %v598, %v317
    %v600 = vsub.f32 %v595, %v599
    %v601 = vmul.f32 %v600, %v600
    %v602 = vsel %vm237, %v601, 0.0
    %603 = vadd.xlane.f32.xlu0 %v602
    %v604 = vpop.xlane.xlu0 %603
    %v605 = vmul.f32 %v604, %v317
    %v606 = vadd.f32 %v605, 1e-05
    %v607 = vrsqrt.pop %v606
    %v608 = vmul.f32 %v600, %v607
    %v609 = vmul.f32 %v608, %v331
    %v610 = vadd.f32 %v609, %v336
    %v612 = vsel %vm237, %v610, 0
    %614 = vmatprep.subr.mxu0 0.0
    %615 = vmatpush1.msra.mxu0 0.0
    %616 = vmatprep.subr.mxu0 0.0
    %617 = vmatpush1.msra.mxu0 0.0
    %618 = vmatprep.subr.mxu0 0.0
    %619 = vmatpush1.msra.mxu0 0.0
    %620 = vmatprep.subr.mxu0 0.0
    %621 = vmatpush1.msra.mxu0 0.0
    %622 = vmatprep.subr.mxu0 0.0
    %623 = vmatpush1.msra.mxu0 0.0
    %624 = vmatprep.subr.mxu0 0.0
    %625 = vmatpush1.msra.mxu0 0.0
    %626 = vmatprep.subr.mxu0 0.0
    %627 = vmatpush1.msra.mxu0 0.0
    %628 = vmatprep.subr.mxu0 0.0
    %629 = vmatpush1.msra.mxu0 0.0
    %630 = vmatprep.subr.mxu0 0.0
    %631 = vmatpush1.msra.mxu0 0.0
    %632 = vmatprep.subr.mxu0 0.0
    %633 = vmatpush1.msra.mxu0 0.0
    %634 = vmatprep.subr.mxu0 0.0
    %635 = vmatpush1.msra.mxu0 0.0
    %636 = vmatprep.subr.mxu0 0.0
    %637 = vmatpush1.msra.mxu0 0.0
    %638 = vmatprep.subr.mxu0 0.0
    %639 = vmatpush1.msra.mxu0 %v223
    %640 = vmatprep.subr.mxu0 0.0
    %641 = vmatpush1.msra.mxu0 %v222
    %642 = vmatprep.subr.mxu0 0.0
    %643 = vmatpush1.msra.mxu0 %v221
    %644 = vmatprep.subr.mxu0 0.0
    %645 = vmatpush1.msra.mxu0 %v220
    %646 = vmatprep.subr.mxu0 0.0
    %647 = vmatpush2.msra.mxu0 0.0
    %648 = vmatprep.subr.mxu0 0.0
    %649 = vmatpush2.msra.mxu0 0.0
    %650 = vmatprep.subr.mxu0 0.0
    %651 = vmatpush2.msra.mxu0 0.0
    %652 = vmatprep.subr.mxu0 0.0
    %653 = vmatpush2.msra.mxu0 0.0
    %654 = vmatprep.subr.mxu0 0.0
    %655 = vmatpush2.msra.mxu0 0.0
    %656 = vmatprep.subr.mxu0 0.0
    %657 = vmatpush2.msra.mxu0 0.0
    %658 = vmatprep.subr.mxu0 0.0
    %659 = vmatpush2.msra.mxu0 0.0
    %660 = vmatprep.subr.mxu0 0.0
    %661 = vmatpush2.msra.mxu0 0.0
    %662 = vmatprep.subr.mxu0 0.0
    %663 = vmatpush2.msra.mxu0 0.0
    %664 = vmatprep.subr.mxu0 0.0
    %665 = vmatpush2.msra.mxu0 0.0
    %666 = vmatprep.subr.mxu0 0.0
    %667 = vmatpush2.msra.mxu0 0.0
    %668 = vmatprep.subr.mxu0 0.0
    %669 = vmatpush2.msra.mxu0 0.0
    %670 = vmatprep.subr.mxu0 0.0
    %671 = vmatpush2.msra.mxu0 0.0
    %672 = vmatprep.subr.mxu0 0.0
    %673 = vmatpush2.msra.mxu0 0.0
    %674 = vmatprep.subr.mxu0 0.0
    %675 = vmatpush2.msra.mxu0 0.0
    %676 = vmatprep.subr.mxu0 0.0
    %677 = vmatpush2.msra.mxu0 0.0
    %678 = vmatprep.mubr.f32.mxu0 0.0
    %679 = vmatmul.mubr.f32.gmra.mxu0 %v612
    %v680 = vpop.f32.mrf.mxu0
    %v681 = vadd.f32 %v342, %v680
    %v682 = vpop.f32.mrf.mxu0
    %683 = vdwg.mxu0
    %v684 = vmax.f32 %v681, 0.0
    %v686 = vsel %vm422, %v684, 0
    %688 = vmatprep.subr.mxu0 0.0
    %689 = vmatpush1.msra.mxu0 0.0
    %690 = vmatprep.subr.mxu0 0.0
    %691 = vmatpush1.msra.mxu0 0.0
    %692 = vmatprep.subr.mxu0 0.0
    %693 = vmatpush1.msra.mxu0 0.0
    %694 = vmatprep.subr.mxu0 0.0
    %695 = vmatpush1.msra.mxu0 0.0
    %696 = vmatprep.subr.mxu0 0.0
    %697 = vmatpush1.msra.mxu0 0.0
    %698 = vmatprep.subr.mxu0 0.0
    %699 = vmatpush1.msra.mxu0 0.0
    %700 = vmatprep.subr.mxu0 0.0
    %701 = vmatpush1.msra.mxu0 0.0
    %702 = vmatprep.subr.mxu0 0.0
    %703 = vmatpush1.msra.mxu0 0.0
    %704 = vmatprep.subr.mxu0 0.0
    %705 = vmatpush1.msra.mxu0 %v231
    %706 = vmatprep.subr.mxu0 0.0
    %707 = vmatpush1.msra.mxu0 %v230
    %708 = vmatprep.subr.mxu0 0.0
    %709 = vmatpush1.msra.mxu0 %v229
    %710 = vmatprep.subr.mxu0 0.0
    %711 = vmatpush1.msra.mxu0 %v228
    %712 = vmatprep.subr.mxu0 0.0
    %713 = vmatpush1.msra.mxu0 %v227
    %714 = vmatprep.subr.mxu0 0.0
    %715 = vmatpush1.msra.mxu0 %v226
    %716 = vmatprep.subr.mxu0 0.0
    %717 = vmatpush1.msra.mxu0 %v225
    %718 = vmatprep.subr.mxu0 0.0
    %719 = vmatpush1.msra.mxu0 %v224
    %720 = vmatprep.subr.mxu0 0.0
    %721 = vmatpush2.msra.mxu0 0.0
    %722 = vmatprep.subr.mxu0 0.0
    %723 = vmatpush2.msra.mxu0 0.0
    %724 = vmatprep.subr.mxu0 0.0
    %725 = vmatpush2.msra.mxu0 0.0
    %726 = vmatprep.subr.mxu0 0.0
    %727 = vmatpush2.msra.mxu0 0.0
    %728 = vmatprep.subr.mxu0 0.0
    %729 = vmatpush2.msra.mxu0 0.0
    %730 = vmatprep.subr.mxu0 0.0
    %731 = vmatpush2.msra.mxu0 0.0
    %732 = vmatprep.subr.mxu0 0.0
    %733 = vmatpush2.msra.mxu0 0.0
    %734 = vmatprep.subr.mxu0 0.0
    %735 = vmatpush2.msra.mxu0 0.0
    %736 = vmatprep.subr.mxu0 0.0
    %737 = vmatpush2.msra.mxu0 0.0
    %738 = vmatprep.subr.mxu0 0.0
    %739 = vmatpush2.msra.mxu0 0.0
    %740 = vmatprep.subr.mxu0 0.0
    %741 = vmatpush2.msra.mxu0 0.0
    %742 = vmatprep.subr.mxu0 0.0
    %743 = vmatpush2.msra.mxu0 0.0
    %744 = vmatprep.subr.mxu0 0.0
    %745 = vmatpush2.msra.mxu0 0.0
    %746 = vmatprep.subr.mxu0 0.0
    %747 = vmatpush2.msra.mxu0 0.0
    %748 = vmatprep.subr.mxu0 0.0
    %749 = vmatpush2.msra.mxu0 0.0
    %750 = vmatprep.subr.mxu0 0.0
    %751 = vmatpush2.msra.mxu0 0.0
    %752 = vmatprep.mubr.f32.mxu0 0.0
    %753 = vmatmul.mubr.f32.gmra.mxu0 %v686
    %v754 = vpop.f32.mrf.mxu0
    %v755 = vadd.f32 %v421, %v754
    %v756 = vpop.f32.mrf.mxu0
    %757 = vdwg.mxu0
    %v758 = vadd.f32 %v610, %v755
    %v759 = vsel %vm237, %v758, 0.0
    %760 = vadd.xlane.f32.xlu0 %v759
    %v761 = vpop.xlane.xlu0 %760
    %v762 = vmul.f32 %v761, %v317
    %v763 = vsub.f32 %v758, %v762
    %v764 = vmul.f32 %v763, %v763
    %v765 = vsel %vm237, %v764, 0.0
    %766 = vadd.xlane.f32.xlu0 %v765
    %v767 = vpop.xlane.xlu0 %766
    %v768 = vmul.f32 %v767, %v317
    %v769 = vadd.f32 %v768, 1e-05
    %v770 = vrsqrt.pop %v769
    %v771 = vmul.f32 %v763, %v770
    %v772 = vmul.f32 %v771, %v515
    %v773 = vadd.f32 %v772, %v520
    %v774 = vld [vmem:[%s3 + $0x70] sm:$0xff]
    %v775 = vld [vmem:[%s3 + $0x78] sm:$0xff]
    %v776 = vld [vmem:[%s3 + $0x80] sm:$0xff]
    %v777 = vld [vmem:[%s3 + $0x88] sm:$0xff]
    %v778 = vld [vmem:[%s3 + $0x90] sm:$0xff]
    %v779 = vld [vmem:[%s3 + $0x98] sm:$0xff]
    %v780 = vld [vmem:[%s3 + $0xa0] sm:$0xff]
    %v781 = vld [vmem:[%s3 + $0xa8] sm:$0xff]
    %v782 = vld [vmem:[%s4 + $0x20] sm:$0xff]
    %v783 = vld [vmem:[%s4 + $0x28] sm:$0xff]
    %v784 = vld [vmem:[%s4 + $0x30] sm:$0xff]
    %v785 = vld [vmem:[%s4 + $0x38] sm:$0xff]
    %v786 = vld [vmem:[%s3 + $0xb0] sm:$0xff]
    %v787 = vld [vmem:[%s3 + $0xb8] sm:$0xff]
    %v788 = vld [vmem:[%s3 + $0xc0] sm:$0xff]
    %v789 = vld [vmem:[%s3 + $0xc8] sm:$0xff]
    %v790 = vld [vmem:[%s3 + $0xd0] sm:$0xff]
    %v791 = vld [vmem:[%s3 + $0xd8] sm:$0xff]
    %v792 = vld [vmem:[%s3 + $0xe0] sm:$0xff]
    %v793 = vld [vmem:[%s3 + $0xe8] sm:$0xff]
    %v794 = vld [vmem:[%s6 + $0x7] sm:$0x1]
    %v795 = vlaneseq
    %v796 = vshrl.u32 %v795, 7
    %v797 = vsub.s32 0, %v796
    %v798 = vrot.slane %v794, %v797
    %v800 = vsel %vm237, %v773, 0
    %802 = vmatprep.subr.mxu0 0.0
    %803 = vmatpush1.msra.mxu0 0.0
    %804 = vmatprep.subr.mxu0 0.0
    %805 = vmatpush1.msra.mxu0 0.0
    %806 = vmatprep.subr.mxu0 0.0
    %807 = vmatpush1.msra.mxu0 0.0
    %808 = vmatprep.subr.mxu0 0.0
    %809 = vmatpush1.msra.mxu0 0.0
    %810 = vmatprep.subr.mxu0 0.0
    %811 = vmatpush1.msra.mxu0 0.0
    %812 = vmatprep.subr.mxu0 0.0
    %813 = vmatpush1.msra.mxu0 0.0
    %814 = vmatprep.subr.mxu0 0.0
    %815 = vmatpush1.msra.mxu0 0.0
    %816 = vmatprep.subr.mxu0 0.0
    %817 = vmatpush1.msra.mxu0 0.0
    %818 = vmatprep.subr.mxu0 0.0
    %819 = vmatpush1.msra.mxu0 0.0
    %820 = vmatprep.subr.mxu0 0.0
    %821 = vmatpush1.msra.mxu0 0.0
    %822 = vmatprep.subr.mxu0 0.0
    %823 = vmatpush1.msra.mxu0 0.0
    %824 = vmatprep.subr.mxu0 0.0
    %825 = vmatpush1.msra.mxu0 0.0
    %826 = vmatprep.subr.mxu0 0.0
    %827 = vmatpush1.msra.mxu0 %v777
    %828 = vmatprep.subr.mxu0 0.0
    %829 = vmatpush1.msra.mxu0 %v776
    %830 = vmatprep.subr.mxu0 0.0
    %831 = vmatpush1.msra.mxu0 %v775
    %832 = vmatprep.subr.mxu0 0.0
    %833 = vmatpush1.msra.mxu0 %v774
    %834 = vmatprep.subr.mxu0 0.0
    %835 = vmatpush2.msra.mxu0 0.0
    %836 = vmatprep.subr.mxu0 0.0
    %837 = vmatpush2.msra.mxu0 0.0
    %838 = vmatprep.subr.mxu0 0.0
    %839 = vmatpush2.msra.mxu0 0.0
    %840 = vmatprep.subr.mxu0 0.0
    %841 = vmatpush2.msra.mxu0 0.0
    %842 = vmatprep.subr.mxu0 0.0
    %843 = vmatpush2.msra.mxu0 0.0
    %844 = vmatprep.subr.mxu0 0.0
    %845 = vmatpush2.msra.mxu0 0.0
    %846 = vmatprep.subr.mxu0 0.0
    %847 = vmatpush2.msra.mxu0 0.0
    %848 = vmatprep.subr.mxu0 0.0
    %849 = vmatpush2.msra.mxu0 0.0
    %850 = vmatprep.subr.mxu0 0.0
    %851 = vmatpush2.msra.mxu0 0.0
    %852 = vmatprep.subr.mxu0 0.0
    %853 = vmatpush2.msra.mxu0 0.0
    %854 = vmatprep.subr.mxu0 0.0
    %855 = vmatpush2.msra.mxu0 0.0
    %856 = vmatprep.subr.mxu0 0.0
    %857 = vmatpush2.msra.mxu0 0.0
    %858 = vmatprep.subr.mxu0 0.0
    %859 = vmatpush2.msra.mxu0 0.0
    %860 = vmatprep.subr.mxu0 0.0
    %861 = vmatpush2.msra.mxu0 0.0
    %862 = vmatprep.subr.mxu0 0.0
    %863 = vmatpush2.msra.mxu0 0.0
    %864 = vmatprep.subr.mxu0 0.0
    %865 = vmatpush2.msra.mxu0 0.0
    %866 = vmatprep.mubr.f32.mxu0 0.0
    %867 = vmatmul.mubr.f32.gmra.mxu0 %v800
    %v868 = vpop.f32.mrf.mxu0
    %v869 = vadd.f32 %v798, %v868
    %v870 = vpop.f32.mrf.mxu0
    %871 = vdwg.mxu0
    %v872 = vadd.f32 %v773, %v869
    %v873 = vld [vmem:[%s6 + $0xa] sm:$0x1]
    %v874 = vld [vmem:[%s6 + $0xb] sm:$0x1]
    %v875 = vsel %vm237, %v872, 0.0
    %876 = vadd.xlane.f32.xlu0 %v875
    %v877 = vpop.xlane.xlu0 %876
    %v878 = vmul.f32 %v877, %v317
    %v879 = vsub.f32 %v872, %v878
    %v880 = vmul.f32 %v879, %v879
    %v881 = vsel %vm237, %v880, 0.0
    %882 = vadd.xlane.f32.xlu0 %v881
    %v883 = vpop.xlane.xlu0 %882
    %v884 = vmul.f32 %v883, %v317
    %v885 = vadd.f32 %v884, 1e-05
    %v886 = vrsqrt.pop %v885
    %v887 = vmul.f32 %v879, %v886
    %v888 = vlaneseq
    %v889 = vshrl.u32 %v888, 7
    %v890 = vsub.s32 0, %v889
    %v891 = vrot.slane %v873, %v890
    %v892 = vmul.f32 %v887, %v891
    %v893 = vlaneseq
    %v894 = vshrl.u32 %v893, 7
    %v895 = vsub.s32 0, %v894
    %v896 = vrot.slane %v874, %v895
    %v897 = vadd.f32 %v892, %v896
    %v898 = vld [vmem:[%s6 + $0x8] sm:$0x1]
    %v899 = vlaneseq
    %v900 = vshrl.u32 %v899, 7
    %v901 = vsub.s32 0, %v900
    %v902 = vrot.slane %v898, %v901
    %v904 = vsel %vm237, %v897, 0
    %906 = vmatprep.subr.mxu0 0.0
    %907 = vmatpush1.msra.mxu0 0.0
    %908 = vmatprep.subr.mxu0 0.0
    %909 = vmatpush1.msra.mxu0 0.0
    %910 = vmatprep.subr.mxu0 0.0
    %911 = vmatpush1.msra.mxu0 0.0
    %912 = vmatprep.subr.mxu0 0.0
    %913 = vmatpush1.msra.mxu0 0.0
    %914 = vmatprep.subr.mxu0 0.0
    %915 = vmatpush1.msra.mxu0 0.0
    %916 = vmatprep.subr.mxu0 0.0
    %917 = vmatpush1.msra.mxu0 0.0
    %918 = vmatprep.subr.mxu0 0.0
    %919 = vmatpush1.msra.mxu0 0.0
    %920 = vmatprep.subr.mxu0 0.0
    %921 = vmatpush1.msra.mxu0 0.0
    %922 = vmatprep.subr.mxu0 0.0
    %923 = vmatpush1.msra.mxu0 0.0
    %924 = vmatprep.subr.mxu0 0.0
    %925 = vmatpush1.msra.mxu0 0.0
    %926 = vmatprep.subr.mxu0 0.0
    %927 = vmatpush1.msra.mxu0 0.0
    %928 = vmatprep.subr.mxu0 0.0
    %929 = vmatpush1.msra.mxu0 0.0
    %930 = vmatprep.subr.mxu0 0.0
    %931 = vmatpush1.msra.mxu0 %v781
    %932 = vmatprep.subr.mxu0 0.0
    %933 = vmatpush1.msra.mxu0 %v780
    %934 = vmatprep.subr.mxu0 0.0
    %935 = vmatpush1.msra.mxu0 %v779
    %936 = vmatprep.subr.mxu0 0.0
    %937 = vmatpush1.msra.mxu0 %v778
    %938 = vmatprep.subr.mxu0 0.0
    %939 = vmatpush2.msra.mxu0 0.0
    %940 = vmatprep.subr.mxu0 0.0
    %941 = vmatpush2.msra.mxu0 0.0
    %942 = vmatprep.subr.mxu0 0.0
    %943 = vmatpush2.msra.mxu0 0.0
    %944 = vmatprep.subr.mxu0 0.0
    %945 = vmatpush2.msra.mxu0 0.0
    %946 = vmatprep.subr.mxu0 0.0
    %947 = vmatpush2.msra.mxu0 0.0
    %948 = vmatprep.subr.mxu0 0.0
    %949 = vmatpush2.msra.mxu0 0.0
    %950 = vmatprep.subr.mxu0 0.0
    %951 = vmatpush2.msra.mxu0 0.0
    %952 = vmatprep.subr.mxu0 0.0
    %953 = vmatpush2.msra.mxu0 0.0
    %954 = vmatprep.subr.mxu0 0.0
    %955 = vmatpush2.msra.mxu0 0.0
    %956 = vmatprep.subr.mxu0 0.0
    %957 = vmatpush2.msra.mxu0 0.0
    %958 = vmatprep.subr.mxu0 0.0
    %959 = vmatpush2.msra.mxu0 0.0
    %960 = vmatprep.subr.mxu0 0.0
    %961 = vmatpush2.msra.mxu0 0.0
    %962 = vmatprep.subr.mxu0 0.0
    %963 = vmatpush2.msra.mxu0 0.0
    %964 = vmatprep.subr.mxu0 0.0
    %965 = vmatpush2.msra.mxu0 0.0
    %966 = vmatprep.subr.mxu0 0.0
    %967 = vmatpush2.msra.mxu0 0.0
    %968 = vmatprep.subr.mxu0 0.0
    %969 = vmatpush2.msra.mxu0 0.0
    %970 = vmatprep.mubr.f32.mxu0 0.0
    %971 = vmatmul.mubr.f32.gmra.mxu0 %v904
    %v972 = vpop.f32.mrf.mxu0
    %v973 = vadd.f32 %v902, %v972
    %v974 = vpop.f32.mrf.mxu0
    %975 = vdwg.mxu0
    %v976 = vadd.f32 %v897, %v973
    %v977 = vld [vmem:[%s6 + $0xc] sm:$0x1]
    %v978 = vld [vmem:[%s6 + $0xd] sm:$0x1]
    %v979 = vsel %vm237, %v976, 0.0
    %980 = vadd.xlane.f32.xlu0 %v979
    %v981 = vpop.xlane.xlu0 %980
    %v982 = vmul.f32 %v981, %v317
    %v983 = vsub.f32 %v976, %v982
    %v984 = vmul.f32 %v983, %v983
    %v985 = vsel %vm237, %v984, 0.0
    %986 = vadd.xlane.f32.xlu0 %v985
    %v987 = vpop.xlane.xlu0 %986
    %v988 = vmul.f32 %v987, %v317
    %v989 = vadd.f32 %v988, 1e-05
    %v990 = vrsqrt.pop %v989
    %v991 = vmul.f32 %v983, %v990
    %v992 = vlaneseq
    %v993 = vshrl.u32 %v992, 7
    %v994 = vsub.s32 0, %v993
    %v995 = vrot.slane %v977, %v994
    %v996 = vmul.f32 %v991, %v995
    %v997 = vlaneseq
    %v998 = vshrl.u32 %v997, 7
    %v999 = vsub.s32 0, %v998
    %v1000 = vrot.slane %v978, %v999
    %v1001 = vadd.f32 %v996, %v1000
    %v1002 = vld [vmem:[%s7 + $0x1] sm:$0x1]
    %v1003 = vlaneseq
    %v1004 = vshrl.u32 %v1003, 7
    %v1005 = vsub.s32 0, %v1004
    %v1006 = vrot.slane %v1002, %v1005
    %v1008 = vsel %vm237, %v1001, 0
    %1010 = vmatprep.subr.mxu0 0.0
    %1011 = vmatpush1.msra.mxu0 0.0
    %1012 = vmatprep.subr.mxu0 0.0
    %1013 = vmatpush1.msra.mxu0 0.0
    %1014 = vmatprep.subr.mxu0 0.0
    %1015 = vmatpush1.msra.mxu0 0.0
    %1016 = vmatprep.subr.mxu0 0.0
    %1017 = vmatpush1.msra.mxu0 0.0
    %1018 = vmatprep.subr.mxu0 0.0
    %1019 = vmatpush1.msra.mxu0 0.0
    %1020 = vmatprep.subr.mxu0 0.0
    %1021 = vmatpush1.msra.mxu0 0.0
    %1022 = vmatprep.subr.mxu0 0.0
    %1023 = vmatpush1.msra.mxu0 0.0
    %1024 = vmatprep.subr.mxu0 0.0
    %1025 = vmatpush1.msra.mxu0 0.0
    %1026 = vmatprep.subr.mxu0 0.0
    %1027 = vmatpush1.msra.mxu0 0.0
    %1028 = vmatprep.subr.mxu0 0.0
    %1029 = vmatpush1.msra.mxu0 0.0
    %1030 = vmatprep.subr.mxu0 0.0
    %1031 = vmatpush1.msra.mxu0 0.0
    %1032 = vmatprep.subr.mxu0 0.0
    %1033 = vmatpush1.msra.mxu0 0.0
    %1034 = vmatprep.subr.mxu0 0.0
    %1035 = vmatpush1.msra.mxu0 %v785
    %1036 = vmatprep.subr.mxu0 0.0
    %1037 = vmatpush1.msra.mxu0 %v784
    %1038 = vmatprep.subr.mxu0 0.0
    %1039 = vmatpush1.msra.mxu0 %v783
    %1040 = vmatprep.subr.mxu0 0.0
    %1041 = vmatpush1.msra.mxu0 %v782
    %1042 = vmatprep.subr.mxu0 0.0
    %1043 = vmatpush2.msra.mxu0 0.0
    %1044 = vmatprep.subr.mxu0 0.0
    %1045 = vmatpush2.msra.mxu0 0.0
    %1046 = vmatprep.subr.mxu0 0.0
    %1047 = vmatpush2.msra.mxu0 0.0
    %1048 = vmatprep.subr.mxu0 0.0
    %1049 = vmatpush2.msra.mxu0 0.0
    %1050 = vmatprep.subr.mxu0 0.0
    %1051 = vmatpush2.msra.mxu0 0.0
    %1052 = vmatprep.subr.mxu0 0.0
    %1053 = vmatpush2.msra.mxu0 0.0
    %1054 = vmatprep.subr.mxu0 0.0
    %1055 = vmatpush2.msra.mxu0 0.0
    %1056 = vmatprep.subr.mxu0 0.0
    %1057 = vmatpush2.msra.mxu0 0.0
    %1058 = vmatprep.subr.mxu0 0.0
    %1059 = vmatpush2.msra.mxu0 0.0
    %1060 = vmatprep.subr.mxu0 0.0
    %1061 = vmatpush2.msra.mxu0 0.0
    %1062 = vmatprep.subr.mxu0 0.0
    %1063 = vmatpush2.msra.mxu0 0.0
    %1064 = vmatprep.subr.mxu0 0.0
    %1065 = vmatpush2.msra.mxu0 0.0
    %1066 = vmatprep.subr.mxu0 0.0
    %1067 = vmatpush2.msra.mxu0 0.0
    %1068 = vmatprep.subr.mxu0 0.0
    %1069 = vmatpush2.msra.mxu0 0.0
    %1070 = vmatprep.subr.mxu0 0.0
    %1071 = vmatpush2.msra.mxu0 0.0
    %1072 = vmatprep.subr.mxu0 0.0
    %1073 = vmatpush2.msra.mxu0 0.0
    %1074 = vmatprep.mubr.f32.mxu0 0.0
    %1075 = vmatmul.mubr.f32.gmra.mxu0 %v1008
    %v1076 = vpop.f32.mrf.mxu0
    %v1077 = vadd.f32 %v1006, %v1076
    %v1078 = vpop.f32.mrf.mxu0
    %1079 = vdwg.mxu0
    %v1080 = vmax.f32 %v1077, 0.0
    %v1081 = vld [vmem:[%s6 + $0x9] sm:$0x1]
    %v1082 = vlaneseq
    %v1083 = vshrl.u32 %v1082, 7
    %v1084 = vsub.s32 0, %v1083
    %v1085 = vrot.slane %v1081, %v1084
    %v1087 = vsel %vm422, %v1080, 0
    %1089 = vmatprep.subr.mxu0 0.0
    %1090 = vmatpush1.msra.mxu0 0.0
    %1091 = vmatprep.subr.mxu0 0.0
    %1092 = vmatpush1.msra.mxu0 0.0
    %1093 = vmatprep.subr.mxu0 0.0
    %1094 = vmatpush1.msra.mxu0 0.0
    %1095 = vmatprep.subr.mxu0 0.0
    %1096 = vmatpush1.msra.mxu0 0.0
    %1097 = vmatprep.subr.mxu0 0.0
    %1098 = vmatpush1.msra.mxu0 0.0
    %1099 = vmatprep.subr.mxu0 0.0
    %1100 = vmatpush1.msra.mxu0 0.0
    %1101 = vmatprep.subr.mxu0 0.0
    %1102 = vmatpush1.msra.mxu0 0.0
    %1103 = vmatprep.subr.mxu0 0.0
    %1104 = vmatpush1.msra.mxu0 0.0
    %1105 = vmatprep.subr.mxu0 0.0
    %1106 = vmatpush1.msra.mxu0 %v793
    %1107 = vmatprep.subr.mxu0 0.0
    %1108 = vmatpush1.msra.mxu0 %v792
    %1109 = vmatprep.subr.mxu0 0.0
    %1110 = vmatpush1.msra.mxu0 %v791
    %1111 = vmatprep.subr.mxu0 0.0
    %1112 = vmatpush1.msra.mxu0 %v790
    %1113 = vmatprep.subr.mxu0 0.0
    %1114 = vmatpush1.msra.mxu0 %v789
    %1115 = vmatprep.subr.mxu0 0.0
    %1116 = vmatpush1.msra.mxu0 %v788
    %1117 = vmatprep.subr.mxu0 0.0
    %1118 = vmatpush1.msra.mxu0 %v787
    %1119 = vmatprep.subr.mxu0 0.0
    %1120 = vmatpush1.msra.mxu0 %v786
    %1121 = vmatprep.subr.mxu0 0.0
    %1122 = vmatpush2.msra.mxu0 0.0
    %1123 = vmatprep.subr.mxu0 0.0
    %1124 = vmatpush2.msra.mxu0 0.0
    %1125 = vmatprep.subr.mxu0 0.0
    %1126 = vmatpush2.msra.mxu0 0.0
    %1127 = vmatprep.subr.mxu0 0.0
    %1128 = vmatpush2.msra.mxu0 0.0
    %1129 = vmatprep.subr.mxu0 0.0
    %1130 = vmatpush2.msra.mxu0 0.0
    %1131 = vmatprep.subr.mxu0 0.0
    %1132 = vmatpush2.msra.mxu0 0.0
    %1133 = vmatprep.subr.mxu0 0.0
    %1134 = vmatpush2.msra.mxu0 0.0
    %1135 = vmatprep.subr.mxu0 0.0
    %1136 = vmatpush2.msra.mxu0 0.0
    %1137 = vmatprep.subr.mxu0 0.0
    %1138 = vmatpush2.msra.mxu0 0.0
    %1139 = vmatprep.subr.mxu0 0.0
    %1140 = vmatpush2.msra.mxu0 0.0
    %1141 = vmatprep.subr.mxu0 0.0
    %1142 = vmatpush2.msra.mxu0 0.0
    %1143 = vmatprep.subr.mxu0 0.0
    %1144 = vmatpush2.msra.mxu0 0.0
    %1145 = vmatprep.subr.mxu0 0.0
    %1146 = vmatpush2.msra.mxu0 0.0
    %1147 = vmatprep.subr.mxu0 0.0
    %1148 = vmatpush2.msra.mxu0 0.0
    %1149 = vmatprep.subr.mxu0 0.0
    %1150 = vmatpush2.msra.mxu0 0.0
    %1151 = vmatprep.subr.mxu0 0.0
    %1152 = vmatpush2.msra.mxu0 0.0
    %1153 = vmatprep.mubr.f32.mxu0 0.0
    %1154 = vmatmul.mubr.f32.gmra.mxu0 %v1087
    %v1155 = vpop.f32.mrf.mxu0
    %v1156 = vadd.f32 %v1085, %v1155
    %v1157 = vpop.f32.mrf.mxu0
    %1158 = vdwg.mxu0
    %v1159 = vadd.f32 %v1001, %v1156
    %v1160 = vld [vmem:[%s6 + $0xe] sm:$0x1]
    %v1161 = vld [vmem:[%s6 + $0xf] sm:$0x1]
    %v1162 = vsel %vm237, %v1159, 0.0
    %1163 = vadd.xlane.f32.xlu0 %v1162
    %v1164 = vpop.xlane.xlu0 %1163
    %v1165 = vmul.f32 %v1164, %v317
    %v1166 = vsub.f32 %v1159, %v1165
    %v1167 = vmul.f32 %v1166, %v1166
    %v1168 = vsel %vm237, %v1167, 0.0
    %1169 = vadd.xlane.f32.xlu0 %v1168
    %v1170 = vpop.xlane.xlu0 %1169
    %v1171 = vmul.f32 %v1170, %v317
    %v1172 = vadd.f32 %v1171, 1e-05
    %v1173 = vrsqrt.pop %v1172
    %v1174 = vmul.f32 %v1166, %v1173
    %v1175 = vlaneseq
    %v1176 = vshrl.u32 %v1175, 7
    %v1177 = vsub.s32 0, %v1176
    %v1178 = vrot.slane %v1160, %v1177
    %v1179 = vmul.f32 %v1174, %v1178
    %v1180 = vlaneseq
    %v1181 = vshrl.u32 %v1180, 7
    %v1182 = vsub.s32 0, %v1181
    %v1183 = vrot.slane %v1161, %v1182
    %v1184 = vadd.f32 %v1179, %v1183
    %v1186 = vsel %vm237, %v1184, 0
    %1188 = vmatprep.subr.mxu0 0.0
    %1189 = vmatpush1.msra.mxu0 0.0
    %1190 = vmatprep.subr.mxu0 0.0
    %1191 = vmatpush1.msra.mxu0 0.0
    %1192 = vmatprep.subr.mxu0 0.0
    %1193 = vmatpush1.msra.mxu0 0.0
    %1194 = vmatprep.subr.mxu0 0.0
    %1195 = vmatpush1.msra.mxu0 0.0
    %1196 = vmatprep.subr.mxu0 0.0
    %1197 = vmatpush1.msra.mxu0 0.0
    %1198 = vmatprep.subr.mxu0 0.0
    %1199 = vmatpush1.msra.mxu0 0.0
    %1200 = vmatprep.subr.mxu0 0.0
    %1201 = vmatpush1.msra.mxu0 0.0
    %1202 = vmatprep.subr.mxu0 0.0
    %1203 = vmatpush1.msra.mxu0 0.0
    %1204 = vmatprep.subr.mxu0 0.0
    %1205 = vmatpush1.msra.mxu0 0.0
    %1206 = vmatprep.subr.mxu0 0.0
    %1207 = vmatpush1.msra.mxu0 0.0
    %1208 = vmatprep.subr.mxu0 0.0
    %1209 = vmatpush1.msra.mxu0 0.0
    %1210 = vmatprep.subr.mxu0 0.0
    %1211 = vmatpush1.msra.mxu0 0.0
    %1212 = vmatprep.subr.mxu0 0.0
    %1213 = vmatpush1.msra.mxu0 %v777
    %1214 = vmatprep.subr.mxu0 0.0
    %1215 = vmatpush1.msra.mxu0 %v776
    %1216 = vmatprep.subr.mxu0 0.0
    %1217 = vmatpush1.msra.mxu0 %v775
    %1218 = vmatprep.subr.mxu0 0.0
    %1219 = vmatpush1.msra.mxu0 %v774
    %1220 = vmatprep.subr.mxu0 0.0
    %1221 = vmatpush2.msra.mxu0 0.0
    %1222 = vmatprep.subr.mxu0 0.0
    %1223 = vmatpush2.msra.mxu0 0.0
    %1224 = vmatprep.subr.mxu0 0.0
    %1225 = vmatpush2.msra.mxu0 0.0
    %1226 = vmatprep.subr.mxu0 0.0
    %1227 = vmatpush2.msra.mxu0 0.0
    %1228 = vmatprep.subr.mxu0 0.0
    %1229 = vmatpush2.msra.mxu0 0.0
    %1230 = vmatprep.subr.mxu0 0.0
    %1231 = vmatpush2.msra.mxu0 0.0
    %1232 = vmatprep.subr.mxu0 0.0
    %1233 = vmatpush2.msra.mxu0 0.0
    %1234 = vmatprep.subr.mxu0 0.0
    %1235 = vmatpush2.msra.mxu0 0.0
    %1236 = vmatprep.subr.mxu0 0.0
    %1237 = vmatpush2.msra.mxu0 0.0
    %1238 = vmatprep.subr.mxu0 0.0
    %1239 = vmatpush2.msra.mxu0 0.0
    %1240 = vmatprep.subr.mxu0 0.0
    %1241 = vmatpush2.msra.mxu0 0.0
    %1242 = vmatprep.subr.mxu0 0.0
    %1243 = vmatpush2.msra.mxu0 0.0
    %1244 = vmatprep.subr.mxu0 0.0
    %1245 = vmatpush2.msra.mxu0 0.0
    %1246 = vmatprep.subr.mxu0 0.0
    %1247 = vmatpush2.msra.mxu0 0.0
    %1248 = vmatprep.subr.mxu0 0.0
    %1249 = vmatpush2.msra.mxu0 0.0
    %1250 = vmatprep.subr.mxu0 0.0
    %1251 = vmatpush2.msra.mxu0 0.0
    %1252 = vmatprep.mubr.f32.mxu0 0.0
    %1253 = vmatmul.mubr.f32.gmra.mxu0 %v1186
    %v1254 = vpop.f32.mrf.mxu0
    %v1255 = vadd.f32 %v798, %v1254
    %v1256 = vpop.f32.mrf.mxu0
    %1257 = vdwg.mxu0
    %v1258 = vadd.f32 %v1184, %v1255
    %v1259 = vsel %vm237, %v1258, 0.0
    %1260 = vadd.xlane.f32.xlu0 %v1259
    %v1261 = vpop.xlane.xlu0 %1260
    %v1262 = vmul.f32 %v1261, %v317
    %v1263 = vsub.f32 %v1258, %v1262
    %v1264 = vmul.f32 %v1263, %v1263
    %v1265 = vsel %vm237, %v1264, 0.0
    %1266 = vadd.xlane.f32.xlu0 %v1265
    %v1267 = vpop.xlane.xlu0 %1266
    %v1268 = vmul.f32 %v1267, %v317
    %v1269 = vadd.f32 %v1268, 1e-05
    %v1270 = vrsqrt.pop %v1269
    %v1271 = vmul.f32 %v1263, %v1270
    %v1272 = vmul.f32 %v1271, %v891
    %v1273 = vadd.f32 %v1272, %v896
    %v1275 = vsel %vm237, %v1273, 0
    %1277 = vmatprep.subr.mxu0 0.0
    %1278 = vmatpush1.msra.mxu0 0.0
    %1279 = vmatprep.subr.mxu0 0.0
    %1280 = vmatpush1.msra.mxu0 0.0
    %1281 = vmatprep.subr.mxu0 0.0
    %1282 = vmatpush1.msra.mxu0 0.0
    %1283 = vmatprep.subr.mxu0 0.0
    %1284 = vmatpush1.msra.mxu0 0.0
    %1285 = vmatprep.subr.mxu0 0.0
    %1286 = vmatpush1.msra.mxu0 0.0
    %1287 = vmatprep.subr.mxu0 0.0
    %1288 = vmatpush1.msra.mxu0 0.0
    %1289 = vmatprep.subr.mxu0 0.0
    %1290 = vmatpush1.msra.mxu0 0.0
    %1291 = vmatprep.subr.mxu0 0.0
    %1292 = vmatpush1.msra.mxu0 0.0
    %1293 = vmatprep.subr.mxu0 0.0
    %1294 = vmatpush1.msra.mxu0 0.0
    %1295 = vmatprep.subr.mxu0 0.0
    %1296 = vmatpush1.msra.mxu0 0.0
    %1297 = vmatprep.subr.mxu0 0.0
    %1298 = vmatpush1.msra.mxu0 0.0
    %1299 = vmatprep.subr.mxu0 0.0
    %1300 = vmatpush1.msra.mxu0 0.0
    %1301 = vmatprep.subr.mxu0 0.0
    %1302 = vmatpush1.msra.mxu0 %v781
    %1303 = vmatprep.subr.mxu0 0.0
    %1304 = vmatpush1.msra.mxu0 %v780
    %1305 = vmatprep.subr.mxu0 0.0
    %1306 = vmatpush1.msra.mxu0 %v779
    %1307 = vmatprep.subr.mxu0 0.0
    %1308 = vmatpush1.msra.mxu0 %v778
    %1309 = vmatprep.subr.mxu0 0.0
    %1310 = vmatpush2.msra.mxu0 0.0
    %1311 = vmatprep.subr.mxu0 0.0
    %1312 = vmatpush2.msra.mxu0 0.0
    %1313 = vmatprep.subr.mxu0 0.0
    %1314 = vmatpush2.msra.mxu0 0.0
    %1315 = vmatprep.subr.mxu0 0.0
    %1316 = vmatpush2.msra.mxu0 0.0
    %1317 = vmatprep.subr.mxu0 0.0
    %1318 = vmatpush2.msra.mxu0 0.0
    %1319 = vmatprep.subr.mxu0 0.0
    %1320 = vmatpush2.msra.mxu0 0.0
    %1321 = vmatprep.subr.mxu0 0.0
    %1322 = vmatpush2.msra.mxu0 0.0
    %1323 = vmatprep.subr.mxu0 0.0
    %1324 = vmatpush2.msra.mxu0 0.0
    %1325 = vmatprep.subr.mxu0 0.0
    %1326 = vmatpush2.msra.mxu0 0.0
    %1327 = vmatprep.subr.mxu0 0.0
    %1328 = vmatpush2.msra.mxu0 0.0
    %1329 = vmatprep.subr.mxu0 0.0
    %1330 = vmatpush2.msra.mxu0 0.0
    %1331 = vmatprep.subr.mxu0 0.0
    %1332 = vmatpush2.msra.mxu0 0.0
    %1333 = vmatprep.subr.mxu0 0.0
    %1334 = vmatpush2.msra.mxu0 0.0
    %1335 = vmatprep.subr.mxu0 0.0
    %1336 = vmatpush2.msra.mxu0 0.0
    %1337 = vmatprep.subr.mxu0 0.0
    %1338 = vmatpush2.msra.mxu0 0.0
    %1339 = vmatprep.subr.mxu0 0.0
    %1340 = vmatpush2.msra.mxu0 0.0
    %1341 = vmatprep.mubr.f32.mxu0 0.0
    %1342 = vmatmul.mubr.f32.gmra.mxu0 %v1275
    %v1343 = vpop.f32.mrf.mxu0
    %v1344 = vadd.f32 %v902, %v1343
    %v1345 = vpop.f32.mrf.mxu0
    %1346 = vdwg.mxu0
    %v1347 = vadd.f32 %v1273, %v1344
    %v1348 = vsel %vm237, %v1347, 0.0
    %1349 = vadd.xlane.f32.xlu0 %v1348
    %v1350 = vpop.xlane.xlu0 %1349
    %v1351 = vmul.f32 %v1350, %v317
    %v1352 = vsub.f32 %v1347, %v1351
    %v1353 = vmul.f32 %v1352, %v1352
    %v1354 = vsel %vm237, %v1353, 0.0
    %1355 = vadd.xlane.f32.xlu0 %v1354
    %v1356 = vpop.xlane.xlu0 %1355
    %v1357 = vmul.f32 %v1356, %v317
    %v1358 = vadd.f32 %v1357, 1e-05
    %v1359 = vrsqrt.pop %v1358
    %v1360 = vmul.f32 %v1352, %v1359
    %v1361 = vmul.f32 %v1360, %v995
    %v1362 = vadd.f32 %v1361, %v1000
    %v1364 = vsel %vm237, %v1362, 0
    %1366 = vmatprep.subr.mxu0 0.0
    %1367 = vmatpush1.msra.mxu0 0.0
    %1368 = vmatprep.subr.mxu0 0.0
    %1369 = vmatpush1.msra.mxu0 0.0
    %1370 = vmatprep.subr.mxu0 0.0
    %1371 = vmatpush1.msra.mxu0 0.0
    %1372 = vmatprep.subr.mxu0 0.0
    %1373 = vmatpush1.msra.mxu0 0.0
    %1374 = vmatprep.subr.mxu0 0.0
    %1375 = vmatpush1.msra.mxu0 0.0
    %1376 = vmatprep.subr.mxu0 0.0
    %1377 = vmatpush1.msra.mxu0 0.0
    %1378 = vmatprep.subr.mxu0 0.0
    %1379 = vmatpush1.msra.mxu0 0.0
    %1380 = vmatprep.subr.mxu0 0.0
    %1381 = vmatpush1.msra.mxu0 0.0
    %1382 = vmatprep.subr.mxu0 0.0
    %1383 = vmatpush1.msra.mxu0 0.0
    %1384 = vmatprep.subr.mxu0 0.0
    %1385 = vmatpush1.msra.mxu0 0.0
    %1386 = vmatprep.subr.mxu0 0.0
    %1387 = vmatpush1.msra.mxu0 0.0
    %1388 = vmatprep.subr.mxu0 0.0
    %1389 = vmatpush1.msra.mxu0 0.0
    %1390 = vmatprep.subr.mxu0 0.0
    %1391 = vmatpush1.msra.mxu0 %v785
    %1392 = vmatprep.subr.mxu0 0.0
    %1393 = vmatpush1.msra.mxu0 %v784
    %1394 = vmatprep.subr.mxu0 0.0
    %1395 = vmatpush1.msra.mxu0 %v783
    %1396 = vmatprep.subr.mxu0 0.0
    %1397 = vmatpush1.msra.mxu0 %v782
    %1398 = vmatprep.subr.mxu0 0.0
    %1399 = vmatpush2.msra.mxu0 0.0
    %1400 = vmatprep.subr.mxu0 0.0
    %1401 = vmatpush2.msra.mxu0 0.0
    %1402 = vmatprep.subr.mxu0 0.0
    %1403 = vmatpush2.msra.mxu0 0.0
    %1404 = vmatprep.subr.mxu0 0.0
    %1405 = vmatpush2.msra.mxu0 0.0
    %1406 = vmatprep.subr.mxu0 0.0
    %1407 = vmatpush2.msra.mxu0 0.0
    %1408 = vmatprep.subr.mxu0 0.0
    %1409 = vmatpush2.msra.mxu0 0.0
    %1410 = vmatprep.subr.mxu0 0.0
    %1411 = vmatpush2.msra.mxu0 0.0
    %1412 = vmatprep.subr.mxu0 0.0
    %1413 = vmatpush2.msra.mxu0 0.0
    %1414 = vmatprep.subr.mxu0 0.0
    %1415 = vmatpush2.msra.mxu0 0.0
    %1416 = vmatprep.subr.mxu0 0.0
    %1417 = vmatpush2.msra.mxu0 0.0
    %1418 = vmatprep.subr.mxu0 0.0
    %1419 = vmatpush2.msra.mxu0 0.0
    %1420 = vmatprep.subr.mxu0 0.0
    %1421 = vmatpush2.msra.mxu0 0.0
    %1422 = vmatprep.subr.mxu0 0.0
    %1423 = vmatpush2.msra.mxu0 0.0
    %1424 = vmatprep.subr.mxu0 0.0
    %1425 = vmatpush2.msra.mxu0 0.0
    %1426 = vmatprep.subr.mxu0 0.0
    %1427 = vmatpush2.msra.mxu0 0.0
    %1428 = vmatprep.subr.mxu0 0.0
    %1429 = vmatpush2.msra.mxu0 0.0
    %1430 = vmatprep.mubr.f32.mxu0 0.0
    %1431 = vmatmul.mubr.f32.gmra.mxu0 %v1364
    %v1432 = vpop.f32.mrf.mxu0
    %v1433 = vadd.f32 %v1006, %v1432
    %v1434 = vpop.f32.mrf.mxu0
    %1435 = vdwg.mxu0
    %v1436 = vmax.f32 %v1433, 0.0
    %v1438 = vsel %vm422, %v1436, 0
    %1440 = vmatprep.subr.mxu0 0.0
    %1441 = vmatpush1.msra.mxu0 0.0
    %1442 = vmatprep.subr.mxu0 0.0
    %1443 = vmatpush1.msra.mxu0 0.0
    %1444 = vmatprep.subr.mxu0 0.0
    %1445 = vmatpush1.msra.mxu0 0.0
    %1446 = vmatprep.subr.mxu0 0.0
    %1447 = vmatpush1.msra.mxu0 0.0
    %1448 = vmatprep.subr.mxu0 0.0
    %1449 = vmatpush1.msra.mxu0 0.0
    %1450 = vmatprep.subr.mxu0 0.0
    %1451 = vmatpush1.msra.mxu0 0.0
    %1452 = vmatprep.subr.mxu0 0.0
    %1453 = vmatpush1.msra.mxu0 0.0
    %1454 = vmatprep.subr.mxu0 0.0
    %1455 = vmatpush1.msra.mxu0 0.0
    %1456 = vmatprep.subr.mxu0 0.0
    %1457 = vmatpush1.msra.mxu0 %v793
    %1458 = vmatprep.subr.mxu0 0.0
    %1459 = vmatpush1.msra.mxu0 %v792
    %1460 = vmatprep.subr.mxu0 0.0
    %1461 = vmatpush1.msra.mxu0 %v791
    %1462 = vmatprep.subr.mxu0 0.0
    %1463 = vmatpush1.msra.mxu0 %v790
    %1464 = vmatprep.subr.mxu0 0.0
    %1465 = vmatpush1.msra.mxu0 %v789
    %1466 = vmatprep.subr.mxu0 0.0
    %1467 = vmatpush1.msra.mxu0 %v788
    %1468 = vmatprep.subr.mxu0 0.0
    %1469 = vmatpush1.msra.mxu0 %v787
    %1470 = vmatprep.subr.mxu0 0.0
    %1471 = vmatpush1.msra.mxu0 %v786
    %1472 = vmatprep.subr.mxu0 0.0
    %1473 = vmatpush2.msra.mxu0 0.0
    %1474 = vmatprep.subr.mxu0 0.0
    %1475 = vmatpush2.msra.mxu0 0.0
    %1476 = vmatprep.subr.mxu0 0.0
    %1477 = vmatpush2.msra.mxu0 0.0
    %1478 = vmatprep.subr.mxu0 0.0
    %1479 = vmatpush2.msra.mxu0 0.0
    %1480 = vmatprep.subr.mxu0 0.0
    %1481 = vmatpush2.msra.mxu0 0.0
    %1482 = vmatprep.subr.mxu0 0.0
    %1483 = vmatpush2.msra.mxu0 0.0
    %1484 = vmatprep.subr.mxu0 0.0
    %1485 = vmatpush2.msra.mxu0 0.0
    %1486 = vmatprep.subr.mxu0 0.0
    %1487 = vmatpush2.msra.mxu0 0.0
    %1488 = vmatprep.subr.mxu0 0.0
    %1489 = vmatpush2.msra.mxu0 0.0
    %1490 = vmatprep.subr.mxu0 0.0
    %1491 = vmatpush2.msra.mxu0 0.0
    %1492 = vmatprep.subr.mxu0 0.0
    %1493 = vmatpush2.msra.mxu0 0.0
    %1494 = vmatprep.subr.mxu0 0.0
    %1495 = vmatpush2.msra.mxu0 0.0
    %1496 = vmatprep.subr.mxu0 0.0
    %1497 = vmatpush2.msra.mxu0 0.0
    %1498 = vmatprep.subr.mxu0 0.0
    %1499 = vmatpush2.msra.mxu0 0.0
    %1500 = vmatprep.subr.mxu0 0.0
    %1501 = vmatpush2.msra.mxu0 0.0
    %1502 = vmatprep.subr.mxu0 0.0
    %1503 = vmatpush2.msra.mxu0 0.0
    %1504 = vmatprep.mubr.f32.mxu0 0.0
    %1505 = vmatmul.mubr.f32.gmra.mxu0 %v1438
    %v1506 = vpop.f32.mrf.mxu0
    %v1507 = vadd.f32 %v1085, %v1506
    %v1508 = vpop.f32.mrf.mxu0
    %1509 = vdwg.mxu0
    %v1510 = vadd.f32 %v1362, %v1507
    %v1511 = vsel %vm237, %v1510, 0.0
    %1512 = vadd.xlane.f32.xlu0 %v1511
    %v1513 = vpop.xlane.xlu0 %1512
    %v1514 = vmul.f32 %v1513, %v317
    %v1515 = vsub.f32 %v1510, %v1514
    %v1516 = vmul.f32 %v1515, %v1515
    %v1517 = vsel %vm237, %v1516, 0.0
    %1518 = vadd.xlane.f32.xlu0 %v1517
    %v1519 = vpop.xlane.xlu0 %1518
    %v1520 = vmul.f32 %v1519, %v317
    %v1521 = vadd.f32 %v1520, 1e-05
    %v1522 = vrsqrt.pop %v1521
    %v1523 = vmul.f32 %v1515, %v1522
    %v1524 = vmul.f32 %v1523, %v1178
    %v1525 = vadd.f32 %v1524, %v1183
    %v1526 = vld [vmem:[%s5] sm:$0xff]
    %v1527 = vld [vmem:[%s5 + $0x8] sm:$0xff]
    %v1528 = vld [vmem:[%s5 + $0x10] sm:$0xff]
    %v1529 = vld [vmem:[%s5 + $0x18] sm:$0xff]
    %v1530 = vld [vmem:[%s8] sm:$0x1]
    %v1532 = vlaneseq
    %v1533 = vshrl.u32 %v1532, 7
    %v1534 = vsub.s32 0, %v1533
    %v1535 = vrot.slane %v1530, %v1534
    %v1538 = vsel %vm237, %v1525, 0
    %1540 = vmatprep.subr.mxu0 0.0
    %1541 = vmatpush1.msra.mxu0 0.0
    %1542 = vmatprep.subr.mxu0 0.0
    %1543 = vmatpush1.msra.mxu0 0.0
    %1544 = vmatprep.subr.mxu0 0.0
    %1545 = vmatpush1.msra.mxu0 0.0
    %1546 = vmatprep.subr.mxu0 0.0
    %1547 = vmatpush1.msra.mxu0 0.0
    %1548 = vmatprep.subr.mxu0 0.0
    %1549 = vmatpush1.msra.mxu0 0.0
    %1550 = vmatprep.subr.mxu0 0.0
    %1551 = vmatpush1.msra.mxu0 0.0
    %1552 = vmatprep.subr.mxu0 0.0
    %1553 = vmatpush1.msra.mxu0 0.0
    %1554 = vmatprep.subr.mxu0 0.0
    %1555 = vmatpush1.msra.mxu0 0.0
    %1556 = vmatprep.subr.mxu0 0.0
    %1557 = vmatpush1.msra.mxu0 0.0
    %1558 = vmatprep.subr.mxu0 0.0
    %1559 = vmatpush1.msra.mxu0 0.0
    %1560 = vmatprep.subr.mxu0 0.0
    %1561 = vmatpush1.msra.mxu0 0.0
    %1562 = vmatprep.subr.mxu0 0.0
    %1563 = vmatpush1.msra.mxu0 0.0
    %1564 = vmatprep.subr.mxu0 0.0
    %1565 = vmatpush1.msra.mxu0 %v1529
    %1566 = vmatprep.subr.mxu0 0.0
    %1567 = vmatpush1.msra.mxu0 %v1528
    %1568 = vmatprep.subr.mxu0 0.0
    %1569 = vmatpush1.msra.mxu0 %v1527
    %1570 = vmatprep.subr.mxu0 0.0
    %1571 = vmatpush1.msra.mxu0 %v1526
    %1572 = vmatprep.subr.mxu0 0.0
    %1573 = vmatpush2.msra.mxu0 0.0
    %1574 = vmatprep.subr.mxu0 0.0
    %1575 = vmatpush2.msra.mxu0 0.0
    %1576 = vmatprep.subr.mxu0 0.0
    %1577 = vmatpush2.msra.mxu0 0.0
    %1578 = vmatprep.subr.mxu0 0.0
    %1579 = vmatpush2.msra.mxu0 0.0
    %1580 = vmatprep.subr.mxu0 0.0
    %1581 = vmatpush2.msra.mxu0 0.0
    %1582 = vmatprep.subr.mxu0 0.0
    %1583 = vmatpush2.msra.mxu0 0.0
    %1584 = vmatprep.subr.mxu0 0.0
    %1585 = vmatpush2.msra.mxu0 0.0
    %1586 = vmatprep.subr.mxu0 0.0
    %1587 = vmatpush2.msra.mxu0 0.0
    %1588 = vmatprep.subr.mxu0 0.0
    %1589 = vmatpush2.msra.mxu0 0.0
    %1590 = vmatprep.subr.mxu0 0.0
    %1591 = vmatpush2.msra.mxu0 0.0
    %1592 = vmatprep.subr.mxu0 0.0
    %1593 = vmatpush2.msra.mxu0 0.0
    %1594 = vmatprep.subr.mxu0 0.0
    %1595 = vmatpush2.msra.mxu0 0.0
    %1596 = vmatprep.subr.mxu0 0.0
    %1597 = vmatpush2.msra.mxu0 0.0
    %1598 = vmatprep.subr.mxu0 0.0
    %1599 = vmatpush2.msra.mxu0 0.0
    %1600 = vmatprep.subr.mxu0 0.0
    %1601 = vmatpush2.msra.mxu0 0.0
    %1602 = vmatprep.subr.mxu0 0.0
    %1603 = vmatpush2.msra.mxu0 0.0
    %1604 = vmatprep.mubr.f32.mxu0 0.0
    %1605 = vmatmul.mubr.f32.gmra.mxu0 %v1538
    %v1606 = vpop.f32.mrf.mxu0
    %v1607 = vadd.f32 %v1535, %v1606
    %v1608 = vpop.f32.mrf.mxu0
    %1609 = vdwg.mxu0
    %1610 = vst.msk [vmem:[#allocation2] sm:$0xff] %vm50, %v1607
    // Predicated region
    $region38: #{model_forward.1} parent=1 // pred_check
      _
    $region39: #{model_forward.1} parent=1 // pred_check_branch
      %1612 = sbr.rel (0) target = $region41
    $region40: #{model_forward.1} parent=1 // pred_region
      %s1614 = ssub.s32 128, 128
      %1615 = vsyncadd [#allocation3], %s1614
      %s1617 = sshll.u32 [#allocation2], 4
      %s1618 = int_to_ptr.vmem [resolvable:$true] %s1617
      %1620 = dma.vmem_to_hbm [thread:$0]  %s1618, 128, %s9, [#allocation3]
    $region41: #{model_forward.1} parent=1 // pred_fallthru
      _
    // Predicated region
    $region42: #{model_forward.1} parent=1 // pred_check
      _
    $region43: #{model_forward.1} parent=1 // pred_check_branch
      %1622 = sbr.rel (0) target = $region45
    $region44: #{model_forward.1} parent=1 // pred_region
      %1623 = dma.done [#allocation3], 128
    $region45: #{model_forward.1} parent=1 // pred_fallthru
      _
    %1624 = vsyncpa [#allocation3], 1

</llo_original>
